<compile_context>
chip_gen: v7x
topology: tpu7x:2x2x1
jax: 0.10.0
libtpu: 0.0.40
codegen_flags: <defaults>
</compile_context>

<pallas_src>
import functools

import jax
import jax.numpy as jnp
import numpy as np
from jax import lax
from jax.experimental import pallas as pl
from jax.experimental.pallas import tpu as pltpu


def _round_up(x, m):
    return (x + m - 1) // m * m


# ----------------------------- Pallas kernel --------------------------------
def _lstm_fused_kernel(x_ref, wih_ref, whh_ref, bias_ref, h0_ref, c0_ref,
                       y_ref, hN_ref, cN_ref,
                       gx_sc, h_sc, c_sc, *, seq_len):
    """One (batch-block, time-block) grid step of a fused LSTM layer.

    x_ref   : (TT, BB, D_in) f32/bf16  streamed input block
    wih_ref : (D_in, 4H) bf16          input weight (constant index_map)
    whh_ref : (H,    4H) bf16          recurrent weight (constant index_map)
    bias_ref: (1, 4H)    f32           b_ih + b_hh
    y_ref   : (TT, BB, H) bf16         per-timestep hidden outputs
    hN/cN   : (BB, H) f32              final state (written on last time block)
    gx_sc   : (TT, BB, 4H) f32         scratch: x @ W_ih^T + bias for the block
    h_sc    : (BB, H) bf16             h carry across sequential time blocks
    c_sc    : (BB, H) f32              c carry
    """
    tb = pl.program_id(1)
    nt = pl.num_programs(1)
    TT, BB, d_in = x_ref.shape
    H = h_sc.shape[-1]

    @pl.when(tb == 0)
    def _():
        h_sc[...] = h0_ref[...].astype(h_sc.dtype)
        c_sc[...] = c0_ref[...]

    # ---- fused input projection: one big MXU matmul, M = TT*BB -------------
    xb = x_ref[...].astype(jnp.bfloat16).reshape(TT * BB, d_in)
    gx = jnp.dot(xb, wih_ref[...], preferred_element_type=jnp.float32)
    gx = gx + bias_ref[...]                           # (1, 4H) broadcast, f32
    gx_sc[...] = gx.reshape(TT, BB, 4 * H)

    whh = whh_ref[...]                                # bf16, resident

    def run_block(mask_tail):
        def body(t, carry):
            h_prev, c_prev = carry                    # bf16 (BB,H), f32 (BB,H)
            gates = gx_sc[t] + jnp.dot(h_prev, whh,
                                       preferred_element_type=jnp.float32)
            i_g = jax.nn.sigmoid(gates[:, 0 * H:1 * H])
            f_g = jax.nn.sigmoid(gates[:, 1 * H:2 * H])
            g_g = jnp.tanh(gates[:, 2 * H:3 * H])
            o_g = jax.nn.sigmoid(gates[:, 3 * H:4 * H])
            c_new = f_g * c_prev + i_g * g_g
            h_new = (o_g * jnp.tanh(c_new)).astype(jnp.bfloat16)
            y_ref[t] = h_new.astype(y_ref.dtype)      # bf16 store (lane-dense)
            if mask_tail:
                # freeze the carry on zero-padded timesteps (last block only)
                valid = (tb * TT + t) < seq_len
                h_new = jnp.where(valid, h_new, h_prev)
                c_new = jnp.where(valid, c_new, c_prev)
            return h_new, c_new

        h_fin, c_fin = lax.fori_loop(0, TT, body, (h_sc[...], c_sc[...]),
                                     unroll=True)
        h_sc[...] = h_fin
        c_sc[...] = c_fin

    if seq_len % TT != 0:
        # Only the final time block can contain padded timesteps.
        @pl.when(tb != nt - 1)
        def _():
            run_block(mask_tail=False)

        @pl.when(tb == nt - 1)
        def _():
            run_block(mask_tail=True)
    else:
        run_block(mask_tail=False)

    @pl.when(tb == nt - 1)                            # write final state once
    def _():
        hN_ref[...] = h_sc[...].astype(hN_ref.dtype)
        cN_ref[...] = c_sc[...].astype(cN_ref.dtype)


# ------------------------------ layer wrapper --------------------------------
def _pad_gate_dim(w, h, h_pad):
    """(4*h, ...) -> (4*h_pad, ...), zero-padding each of the i,f,g,o blocks."""
    if h_pad == h:
        return w
    tail = w.shape[1:]
    w4 = w.reshape((4, h) + tail)
    pad = [(0, 0), (0, h_pad - h)] + [(0, 0)] * len(tail)
    return jnp.pad(w4, pad).reshape((4 * h_pad,) + tail)


def _vmem_bytes_estimate(TT, BB, d_in, H, x_itemsize):
    g4 = 4 * H
    n = 0
    n += 2 * TT * BB * d_in * x_itemsize      # x blocks (double-buffered)
    n += 2 * d_in * g4 * 2                    # W_ih^T bf16
    n += 2 * H * g4 * 2                       # W_hh^T bf16
    n += 2 * g4 * 4                           # bias
    n += 2 * 2 * BB * H * 4                   # h0, c0
    n += 2 * TT * BB * H * 2                  # y bf16 blocks
    n += 2 * 2 * BB * H * 4                   # h_T, c_T
    n += TT * BB * g4 * 4                     # gx scratch
    n += BB * H * (2 + 4)                     # h/c carry scratch
    return n
    # TODO(synk): single-buffer the constant-index weight blocks
    # (pipeline_mode=pl.Buffered(1)) to reclaim ~H*4H*2 bytes on v7x.


def lstm_layer_pallas(x, w_ih, w_hh, b_ih, b_hh, h0, c0, *,
                      time_block=16, batch_block=64):
    """One LSTM layer. x: (T, B, D_in). Returns y (T,B,H) bf16, h_T/c_T (B,H) f32."""
    T, B, d_in = x.shape
    H = w_hh.shape[1]
    H_pad = _round_up(H, 128)                 # lane-aligned gates & lane-dense y

    TT = min(time_block, T)
    BB = _round_up(min(batch_block, _round_up(B, 8)), 8)
    T_pad = _round_up(T, TT)
    B_pad = _round_up(B, BB)
    NT, NB = T_pad // TT, B_pad // BB
    # TODO(synk): on v7x pick BB so that NB >= 2 to engage the second TensorCore.

    if (T_pad, B_pad) != (T, B):
        x = jnp.pad(x, ((0, T_pad - T), (0, B_pad - B), (0, 0)))
    if (B_pad, H_pad) != (B, H):
        h0 = jnp.pad(h0, ((0, B_pad - B), (0, H_pad - H)))
        c0 = jnp.pad(c0, ((0, B_pad - B), (0, H_pad - H)))

    # Pad gate / recurrent-input dims to H_pad; padded lanes stay exactly zero.
    wih_t = _pad_gate_dim(w_ih, H, H_pad).T.astype(jnp.bfloat16)        # (d_in, 4H_pad)
    whh_p = jnp.pad(_pad_gate_dim(w_hh, H, H_pad), ((0, 0), (0, H_pad - H)))
    whh_t = whh_p.T.astype(jnp.bfloat16)                                # (H_pad, 4H_pad)
    bias = _pad_gate_dim((b_ih + b_hh).astype(jnp.float32), H, H_pad)
    bias = bias.reshape(1, 4 * H_pad)

    needed = _vmem_bytes_estimate(TT, BB, d_in, H_pad, x.dtype.itemsize)
    try:
        vmem_cap = int(pltpu.get_tpu_info().vmem_capacity_bytes)
    except Exception:
        vmem_cap = 64 * 1024 * 1024
    vmem_limit = max(16 * 1024 * 1024,
                     min(int(needed * 1.25) + (2 << 20), vmem_cap))

    grid_spec = pltpu.PrefetchScalarGridSpec(
        num_scalar_prefetch=0,
        grid=(NB, NT),                        # (parallel batch, sequential time)
        in_specs=[
            pl.BlockSpec((TT, BB, d_in), lambda b, t: (t, b, 0)),        # x
            pl.BlockSpec((d_in, 4 * H_pad), lambda b, t: (0, 0)),        # W_ih^T
            pl.BlockSpec((H_pad, 4 * H_pad), lambda b, t: (0, 0)),       # W_hh^T
            pl.BlockSpec((1, 4 * H_pad), lambda b, t: (0, 0)),           # bias
            pl.BlockSpec((BB, H_pad), lambda b, t: (b, 0)),              # h0
            pl.BlockSpec((BB, H_pad), lambda b, t: (b, 0)),              # c0
        ],
        out_specs=[
            pl.BlockSpec((TT, BB, H_pad), lambda b, t: (t, b, 0)),       # y (bf16)
            pl.BlockSpec((BB, H_pad), lambda b, t: (b, 0)),              # h_T
            pl.BlockSpec((BB, H_pad), lambda b, t: (b, 0)),              # c_T
        ],
        scratch_shapes=[
            pltpu.VMEM((TT, BB, 4 * H_pad), jnp.float32),                # gx
            pltpu.VMEM((BB, H_pad), jnp.bfloat16),                       # h carry
            pltpu.VMEM((BB, H_pad), jnp.float32),                        # c carry
        ],
    )

    y, h_T, c_T = pl.pallas_call(
        functools.partial(_lstm_fused_kernel, seq_len=T),
        grid_spec=grid_spec,
        out_shape=[
            jax.ShapeDtypeStruct((T_pad, B_pad, H_pad), jnp.bfloat16),
            jax.ShapeDtypeStruct((B_pad, H_pad), jnp.float32),
            jax.ShapeDtypeStruct((B_pad, H_pad), jnp.float32),
        ],
        compiler_params=pltpu.CompilerParams(
            dimension_semantics=("parallel", "arbitrary"),
            vmem_limit_bytes=vmem_limit,
        ),
    )(x, wih_t, whh_t, bias, h0, c0)

    if (T_pad, B_pad, H_pad) != (T, B, H):
        y = y[:T, :B, :H]
        h_T = h_T[:B, :H]
        c_T = c_T[:B, :H]
    return y, h_T, c_T


# ---------------------------- Module wrapper ---------------------------------
def init_lstm_params(key, input_size, hidden_size, num_layers,
                     forget_gate_bias=1.0, weights_init_scale=1.0,
                     hidden_hidden_bias_scale=0.0):
    """torch.nn.LSTM-shaped params + the module's forget-gate-bias / scale init."""
    params = []
    k = 1.0 / np.sqrt(hidden_size)
    H = hidden_size
    for layer in range(num_layers):
        d_in = input_size if layer == 0 else hidden_size
        key, k1, k2, k3, k4 = jax.random.split(key, 5)
        w_ih = jax.random.uniform(k1, (4 * H, d_in), jnp.float32, -k, k)
        w_hh = jax.random.uniform(k2, (4 * H, H), jnp.float32, -k, k)
        b_ih = jax.random.uniform(k3, (4 * H,), jnp.float32, -k, k)
        b_hh = jax.random.uniform(k4, (4 * H,), jnp.float32, -k, k)
        w_ih = w_ih * weights_init_scale
        w_hh = w_hh * weights_init_scale
        b_ih = b_ih * weights_init_scale
        b_hh = b_hh * weights_init_scale
        # torch gate order: i, f, g, o
        if forget_gate_bias is not None:
            b_ih = b_ih.at[H:2 * H].set(forget_gate_bias)
            b_hh = b_hh.at[H:2 * H].multiply(hidden_hidden_bias_scale)
        params.append((w_ih, w_hh, b_ih, b_hh))
    return params


def lstm_forward(x, params, h=None, *, time_block=16, batch_block=64):
    """Equivalent of LSTM.forward for batch_norm=False, dropout=0 (eval).

    x: (T, B, input_size). h: None or (h_0, c_0) each (num_layers, B, H).
    Returns (y, (h_n, c_n), all_h) with all_h=None (non-custom LSTM path).
    """
    T, B, _ = x.shape
    H = params[0][1].shape[1]
    h_fl, c_fl = [], []
    out = x
    for layer, (w_ih, w_hh, b_ih, b_hh) in enumerate(params):
        if h is None:
            h0 = jnp.zeros((B, H), jnp.float32)
            c0 = jnp.zeros((B, H), jnp.float32)
        else:
            h0, c0 = h[0][layer], h[1][layer]
        out, h_T, c_T = lstm_layer_pallas(out, w_ih, w_hh, b_ih, b_hh, h0, c0,
                                          time_block=time_block,
                                          batch_block=batch_block)
        h_fl.append(h_T)
        c_fl.append(c_T)
    h_n = jnp.stack(h_fl, axis=0)
    c_n = jnp.stack(c_fl, axis=0)
    # TODO(synk): inter-layer dropout is identity at inference (p=0 here); a
    # fused multi-layer pallas_call would further cut inter-layer HBM traffic.
    return out.astype(jnp.float32), (h_n, c_n), None


# ---------------------------- Pure-JAX reference -----------------------------
def _lstm_layer_ref(x, w_ih, w_hh, b_ih, b_hh, h0, c0, *, match_kernel_precision):
    H = w_hh.shape[1]
    T, B, d_in = x.shape
    bias = (b_ih + b_hh).astype(jnp.float32)
    if match_kernel_precision:
        wih_t = w_ih.T.astype(jnp.bfloat16)
        whh_t = w_hh.T.astype(jnp.bfloat16)
        x_op = x.astype(jnp.bfloat16)
        h0 = h0.astype(jnp.bfloat16)
    else:
        wih_t, whh_t, x_op = w_ih.T, w_hh.T, x.astype(jnp.float32)
    gx = jnp.dot(x_op.reshape(T * B, d_in), wih_t,
                 preferred_element_type=jnp.float32).reshape(T, B, 4 * H) + bias

    def step(carry, gx_t):
        h_prev, c_prev = carry
        gates = gx_t + jnp.dot(h_prev, whh_t, preferred_element_type=jnp.float32)
        i = jax.nn.sigmoid(gates[:, 0 * H:1 * H])
        f = jax.nn.sigmoid(gates[:, 1 * H:2 * H])
        g = jnp.tanh(gates[:, 2 * H:3 * H])
        o = jax.nn.sigmoid(gates[:, 3 * H:4 * H])
        c = f * c_prev + i * g
        h_new = o * jnp.tanh(c)
        if match_kernel_precision:
            h_new = h_new.astype(jnp.bfloat16)   # kernel carries/stores h in bf16
        return (h_new, c), h_new

    (h_T, c_T), ys = lax.scan(step, (h0, c0), gx)
    return ys, h_T.astype(jnp.float32), c_T


def lstm_forward_ref(x, params, h=None, *, match_kernel_precision=True):
    T, B, _ = x.shape
    H = params[0][1].shape[1]
    out = x
    h_fl, c_fl = [], []
    for layer, (w_ih, w_hh, b_ih, b_hh) in enumerate(params):
        if h is None:
            h0 = jnp.zeros((B, H), jnp.float32)
            c0 = jnp.zeros((B, H), jnp.float32)
        else:
            h0, c0 = h[0][layer], h[1][layer]
        out, h_T, c_T = _lstm_layer_ref(out, w_ih, w_hh, b_ih, b_hh, h0, c0,
                                        match_kernel_precision=match_kernel_precision)
        h_fl.append(h_T)
        c_fl.append(c_T)
    return out.astype(jnp.float32), (jnp.stack(h_fl), jnp.stack(c_fl)), None


# ----------------------------------- main ------------------------------------
if __name__ == "__main__":
    input_size, hidden_size, num_layers = 16, 32, 2
    key = jax.random.PRNGKey(0)
    key, kparam = jax.random.split(key)
    params = init_lstm_params(
        kparam, input_size, hidden_size, num_layers,
        forget_gate_bias=1.0, weights_init_scale=1.0,
        hidden_hidden_bias_scale=0.0)

    # ---- case 1: T aligned to the time block, tiny batch ----
    T, B = 8, 2
    key, kx = jax.random.split(key)
    x = jax.random.normal(kx, (T, B, input_size), jnp.float32)

    y, (h_n, c_n), all_h = lstm_forward(x, params, h=None)
    jax.block_until_ready((y, h_n, c_n))

    # check vs a reference matching the kernel's bf16-operand / bf16-h /
    # f32-accumulation math (tolerance covers one bf16 ulp on the outputs)
    y_m, (h_m, c_m), _ = lstm_forward_ref(x, params, h=None, match_kernel_precision=True)
    np.testing.assert_allclose(np.asarray(y), np.asarray(y_m), rtol=1e-2, atol=2e-2)
    np.testing.assert_allclose(np.asarray(h_n), np.asarray(h_m), rtol=1e-2, atol=2e-2)
    np.testing.assert_allclose(np.asarray(c_n), np.asarray(c_m), rtol=1e-2, atol=2e-2)

    # loose sanity check vs full-f32 reference
    y_f, (h_f, c_f), _ = lstm_forward_ref(x, params, h=None, match_kernel_precision=False)
    np.testing.assert_allclose(np.asarray(y), np.asarray(y_f), rtol=0, atol=5e-2)
    np.testing.assert_allclose(np.asarray(h_n), np.asarray(h_f), rtol=0, atol=5e-2)

    assert y.shape == (T, B, hidden_size) and y.dtype == jnp.float32
    assert h_n.shape == (num_layers, B, hidden_size)
    assert c_n.shape == (num_layers, B, hidden_size)
    assert all_h is None

    # ---- case 2: T not divisible by the time block + batch/H padding path ----
    T2, B2 = 20, 3
    key, kx2 = jax.random.split(key)
    x2 = jax.random.normal(kx2, (T2, B2, input_size), jnp.float32)
    y2, (h2, c2), _ = lstm_forward(x2, params, h=None, time_block=16)
    jax.block_until_ready((y2, h2, c2))
    y2_m, (h2_m, c2_m), _ = lstm_forward_ref(x2, params, h=None, match_kernel_precision=True)
    np.testing.assert_allclose(np.asarray(y2), np.asarray(y2_m), rtol=1e-2, atol=2e-2)
    np.testing.assert_allclose(np.asarray(h2), np.asarray(h2_m), rtol=1e-2, atol=2e-2)
    np.testing.assert_allclose(np.asarray(c2), np.asarray(c2_m), rtol=1e-2, atol=2e-2)

    print("KERNEL_OK")
</pallas_src>

<mosaic_0001>
module attributes {stable_mosaic.version = 11 : i64} {
  func.func @_lstm_fused_kernel(%arg0: i32, %arg1: i32, %arg2: memref<8x8x16xf32, #tpu.memory_space<vmem>>, %arg3: memref<16x512xbf16, #tpu.memory_space<vmem>>, %arg4: memref<128x512xbf16, #tpu.memory_space<vmem>>, %arg5: memref<1x512xf32, #tpu.memory_space<vmem>>, %arg6: memref<8x128xf32, #tpu.memory_space<vmem>>, %arg7: memref<8x128xf32, #tpu.memory_space<vmem>>, %arg8: memref<8x8x128xbf16, #tpu.memory_space<vmem>>, %arg9: memref<8x128xf32, #tpu.memory_space<vmem>>, %arg10: memref<8x128xf32, #tpu.memory_space<vmem>>, %arg11: memref<8x8x512xf32, #tpu.memory_space<vmem>>, %arg12: memref<8x128xbf16, #tpu.memory_space<vmem>>, %arg13: memref<8x128xf32, #tpu.memory_space<vmem>>) attributes {dimension_semantics = [#tpu.dimension_semantics<parallel>, #tpu.dimension_semantics<arbitrary>], iteration_bounds = array<i64: 1, 1>, scalar_prefetch = 0 : i64, scratch_operands = 3 : i64, tpu.core_type = #tpu.core_type<tc>, window_params = [{transform_indices = @transform_0, window_bounds = array<i64: 8, 8, 16>}, {pipeline_mode = #tpu.pipeline_mode<synchronous>, transform_indices = @transform_1, window_bounds = array<i64: 16, 512>}, {pipeline_mode = #tpu.pipeline_mode<synchronous>, transform_indices = @transform_2, window_bounds = array<i64: 128, 512>}, {pipeline_mode = #tpu.pipeline_mode<synchronous>, transform_indices = @transform_3, window_bounds = array<i64: 1, 512>}, {transform_indices = @transform_4, window_bounds = array<i64: 8, 128>}, {transform_indices = @transform_5, window_bounds = array<i64: 8, 128>}, {transform_indices = @transform_6, window_bounds = array<i64: 8, 8, 128>}, {transform_indices = @transform_7, window_bounds = array<i64: 8, 128>}, {transform_indices = @transform_8, window_bounds = array<i64: 8, 128>}]} {
    %c0_i32 = arith.constant 0 : i32
    %0 = arith.cmpi eq, %arg1, %c0_i32 : i32
    %1 = arith.extui %0 : i1 to i32
    %c0_i32_0 = arith.constant 0 : i32
    %2 = arith.cmpi ne, %1, %c0_i32_0 : i32
    scf.if %2 {
      %c0_87 = arith.constant 0 : index
      %c0_88 = arith.constant 0 : index
      %301 = vector.load %arg6[%c0_87, %c0_88] : memref<8x128xf32, #tpu.memory_space<vmem>>, vector<8x128xf32>
      %302 = arith.truncf %301 : vector<8x128xf32> to vector<8x128xbf16>
      %c0_89 = arith.constant 0 : index
      %c0_90 = arith.constant 0 : index
      %303 = vector.load %arg12[%c0_89, %c0_90] : memref<8x128xbf16, #tpu.memory_space<vmem>>, vector<8x128xbf16>
      tpu.vector_store %arg12[%c0_89, %c0_90], %302 {strides = array<i32>} : memref<8x128xbf16, #tpu.memory_space<vmem>>, vector<8x128xbf16>,
      %c0_91 = arith.constant 0 : index
      %c0_92 = arith.constant 0 : index
      %304 = vector.load %arg7[%c0_91, %c0_92] : memref<8x128xf32, #tpu.memory_space<vmem>>, vector<8x128xf32>
      %c0_93 = arith.constant 0 : index
      %c0_94 = arith.constant 0 : index
      %305 = vector.load %arg13[%c0_93, %c0_94] : memref<8x128xf32, #tpu.memory_space<vmem>>, vector<8x128xf32>
      tpu.vector_store %arg13[%c0_93, %c0_94], %304 {strides = array<i32>} : memref<8x128xf32, #tpu.memory_space<vmem>>, vector<8x128xf32>,
    } else {
    }
    %c0 = arith.constant 0 : index
    %c0_1 = arith.constant 0 : index
    %c0_2 = arith.constant 0 : index
    %3 = vector.load %arg2[%c0, %c0_1, %c0_2] : memref<8x8x16xf32, #tpu.memory_space<vmem>>, vector<8x8x16xf32>
    %4 = arith.truncf %3 : vector<8x8x16xf32> to vector<8x8x16xbf16>
    %5 = vector.shape_cast %4 : vector<8x8x16xbf16> to vector<64x16xbf16>
    %c0_3 = arith.constant 0 : index
    %c0_4 = arith.constant 0 : index
    %6 = vector.load %arg3[%c0_3, %c0_4] : memref<16x512xbf16, #tpu.memory_space<vmem>>, vector<16x512xbf16>
    %cst = arith.constant dense<0.000000e+00> : vector<64x512xf32>
    %7 = tpu.matmul %5, %6, %cst {dimension_numbers = #tpu.dot_dimension_numbers<[1], [0], [0], [1], [0, 0, 1, 1], [], []>} : vector<64x16xbf16>, vector<16x512xbf16>, vector<64x512xf32> -> vector<64x512xf32>
    %c0_5 = arith.constant 0 : index
    %c0_6 = arith.constant 0 : index
    %8 = vector.load %arg5[%c0_5, %c0_6] : memref<1x512xf32, #tpu.memory_space<vmem>>, vector<1x512xf32>
    %9 = vector.broadcast %8 : vector<1x512xf32> to vector<64x512xf32>
    %10 = arith.addf %7, %9 : vector<64x512xf32>
    %11 = vector.shape_cast %10 : vector<64x512xf32> to vector<8x8x512xf32>
    %c0_7 = arith.constant 0 : index
    %c0_8 = arith.constant 0 : index
    %c0_9 = arith.constant 0 : index
    %12 = vector.load %arg11[%c0_7, %c0_8, %c0_9] : memref<8x8x512xf32, #tpu.memory_space<vmem>>, vector<8x8x512xf32>
    tpu.vector_store %arg11[%c0_7, %c0_8, %c0_9], %11 {strides = array<i32>} : memref<8x8x512xf32, #tpu.memory_space<vmem>>, vector<8x8x512xf32>,
    %c0_10 = arith.constant 0 : index
    %c0_11 = arith.constant 0 : index
    %13 = vector.load %arg4[%c0_10, %c0_11] : memref<128x512xbf16, #tpu.memory_space<vmem>>, vector<128x512xbf16>
    %c0_12 = arith.constant 0 : index
    %c0_13 = arith.constant 0 : index
    %14 = vector.load %arg12[%c0_12, %c0_13] : memref<8x128xbf16, #tpu.memory_space<vmem>>, vector<8x128xbf16>
    %c0_14 = arith.constant 0 : index
    %c0_15 = arith.constant 0 : index
    %15 = vector.load %arg13[%c0_14, %c0_15] : memref<8x128xf32, #tpu.memory_space<vmem>>, vector<8x128xf32>
    %c0_i32_16 = arith.constant 0 : i32
    %16 = arith.index_cast %c0_i32_16 : i32 to index
    %c0_17 = arith.constant 0 : index
    %c0_18 = arith.constant 0 : index
    %17 = vector.load %arg11[%16, %c0_17, %c0_18] : memref<8x8x512xf32, #tpu.memory_space<vmem>>, vector<1x8x512xf32>
    %18 = vector.shape_cast %17 : vector<1x8x512xf32> to vector<8x512xf32>
    %cst_19 = arith.constant dense<0.000000e+00> : vector<8x512xf32>
    %19 = tpu.matmul %14, %13, %cst_19 {dimension_numbers = #tpu.dot_dimension_numbers<[1], [0], [0], [1], [0, 0, 1, 1], [], []>} : vector<8x128xbf16>, vector<128x512xbf16>, vector<8x512xf32> -> vector<8x512xf32>
    %20 = arith.addf %18, %19 : vector<8x512xf32>
    %21 = vector.extract_strided_slice %20 {offsets = [0, 0], sizes = [8, 128], strides = [1, 1]} : vector<8x512xf32> to vector<8x128xf32>
    %22 = arith.negf %21 : vector<8x128xf32>
    %23 = math.exp %22 : vector<8x128xf32>
    %cst_20 = arith.constant 1.000000e+00 : f32
    %24 = vector.broadcast %cst_20 : f32 to vector<8x128xf32>
    %25 = arith.addf %24, %23 : vector<8x128xf32>
    %26 = arith.divf %24, %25 : vector<8x128xf32>
    %27 = vector.extract_strided_slice %20 {offsets = [0, 128], sizes = [8, 128], strides = [1, 1]} : vector<8x512xf32> to vector<8x128xf32>
    %28 = arith.negf %27 : vector<8x128xf32>
    %29 = math.exp %28 : vector<8x128xf32>
    %cst_21 = arith.constant 1.000000e+00 : f32
    %30 = vector.broadcast %cst_21 : f32 to vector<8x128xf32>
    %31 = arith.addf %30, %29 : vector<8x128xf32>
    %32 = arith.divf %30, %31 : vector<8x128xf32>
    %33 = vector.extract_strided_slice %20 {offsets = [0, 256], sizes = [8, 128], strides = [1, 1]} : vector<8x512xf32> to vector<8x128xf32>
    %34 = math.tanh %33 : vector<8x128xf32>
    %35 = vector.extract_strided_slice %20 {offsets = [0, 384], sizes = [8, 128], strides = [1, 1]} : vector<8x512xf32> to vector<8x128xf32>
    %36 = arith.negf %35 : vector<8x128xf32>
    %37 = math.exp %36 : vector<8x128xf32>
    %cst_22 = arith.constant 1.000000e+00 : f32
    %38 = vector.broadcast %cst_22 : f32 to vector<8x128xf32>
    %39 = arith.addf %38, %37 : vector<8x128xf32>
    %40 = arith.divf %38, %39 : vector<8x128xf32>
    %41 = arith.mulf %32, %15 : vector<8x128xf32>
    %42 = arith.mulf %26, %34 : vector<8x128xf32>
    %43 = arith.addf %41, %42 : vector<8x128xf32>
    %44 = math.tanh %43 : vector<8x128xf32>
    %45 = arith.mulf %40, %44 : vector<8x128xf32>
    %46 = arith.truncf %45 : vector<8x128xf32> to vector<8x128xbf16>
    %47 = arith.index_cast %c0_i32_16 : i32 to index
    %c0_23 = arith.constant 0 : index
    %c0_24 = arith.constant 0 : index
    %48 = vector.load %arg8[%47, %c0_23, %c0_24] : memref<8x8x128xbf16, #tpu.memory_space<vmem>>, vector<1x8x128xbf16>
    %49 = vector.shape_cast %48 : vector<1x8x128xbf16> to vector<8x128xbf16>
    %50 = vector.shape_cast %46 : vector<8x128xbf16> to vector<1x8x128xbf16>
    tpu.vector_store %arg8[%47, %c0_23, %c0_24], %50 {strides = array<i32>} : memref<8x8x128xbf16, #tpu.memory_space<vmem>>, vector<1x8x128xbf16>,
    %c1_i32 = arith.constant 1 : i32
    %51 = arith.index_cast %c1_i32 : i32 to index
    %c0_25 = arith.constant 0 : index
    %c0_26 = arith.constant 0 : index
    %52 = vector.load %arg11[%51, %c0_25, %c0_26] : memref<8x8x512xf32, #tpu.memory_space<vmem>>, vector<1x8x512xf32>
    %53 = vector.shape_cast %52 : vector<1x8x512xf32> to vector<8x512xf32>
    %cst_27 = arith.constant dense<0.000000e+00> : vector<8x512xf32>
    %54 = tpu.matmul %46, %13, %cst_27 {dimension_numbers = #tpu.dot_dimension_numbers<[1], [0], [0], [1], [0, 0, 1, 1], [], []>} : vector<8x128xbf16>, vector<128x512xbf16>, vector<8x512xf32> -> vector<8x512xf32>
    %55 = arith.addf %53, %54 : vector<8x512xf32>
    %56 = vector.extract_strided_slice %55 {offsets = [0, 0], sizes = [8, 128], strides = [1, 1]} : vector<8x512xf32> to vector<8x128xf32>
    %57 = arith.negf %56 : vector<8x128xf32>
    %58 = math.exp %57 : vector<8x128xf32>
    %cst_28 = arith.constant 1.000000e+00 : f32
    %59 = vector.broadcast %cst_28 : f32 to vector<8x128xf32>
    %60 = arith.addf %59, %58 : vector<8x128xf32>
    %61 = arith.divf %59, %60 : vector<8x128xf32>
    %62 = vector.extract_strided_slice %55 {offsets = [0, 128], sizes = [8, 128], strides = [1, 1]} : vector<8x512xf32> to vector<8x128xf32>
    %63 = arith.negf %62 : vector<8x128xf32>
    %64 = math.exp %63 : vector<8x128xf32>
    %cst_29 = arith.constant 1.000000e+00 : f32
    %65 = vector.broadcast %cst_29 : f32 to vector<8x128xf32>
    %66 = arith.addf %65, %64 : vector<8x128xf32>
    %67 = arith.divf %65, %66 : vector<8x128xf32>
    %68 = vector.extract_strided_slice %55 {offsets = [0, 256], sizes = [8, 128], strides = [1, 1]} : vector<8x512xf32> to vector<8x128xf32>
    %69 = math.tanh %68 : vector<8x128xf32>
    %70 = vector.extract_strided_slice %55 {offsets = [0, 384], sizes = [8, 128], strides = [1, 1]} : vector<8x512xf32> to vector<8x128xf32>
    %71 = arith.negf %70 : vector<8x128xf32>
    %72 = math.exp %71 : vector<8x128xf32>
    %cst_30 = arith.constant 1.000000e+00 : f32
    %73 = vector.broadcast %cst_30 : f32 to vector<8x128xf32>
    %74 = arith.addf %73, %72 : vector<8x128xf32>
    %75 = arith.divf %73, %74 : vector<8x128xf32>
    %76 = arith.mulf %67, %43 : vector<8x128xf32>
    %77 = arith.mulf %61, %69 : vector<8x128xf32>
    %78 = arith.addf %76, %77 : vector<8x128xf32>
    %79 = math.tanh %78 : vector<8x128xf32>
    %80 = arith.mulf %75, %79 : vector<8x128xf32>
    %81 = arith.truncf %80 : vector<8x128xf32> to vector<8x128xbf16>
    %82 = arith.index_cast %c1_i32 : i32 to index
    %c0_31 = arith.constant 0 : index
    %c0_32 = arith.constant 0 : index
    %83 = vector.load %arg8[%82, %c0_31, %c0_32] : memref<8x8x128xbf16, #tpu.memory_space<vmem>>, vector<1x8x128xbf16>
    %84 = vector.shape_cast %83 : vector<1x8x128xbf16> to vector<8x128xbf16>
    %85 = vector.shape_cast %81 : vector<8x128xbf16> to vector<1x8x128xbf16>
    tpu.vector_store %arg8[%82, %c0_31, %c0_32], %85 {strides = array<i32>} : memref<8x8x128xbf16, #tpu.memory_space<vmem>>, vector<1x8x128xbf16>,
    %c2_i32 = arith.constant 2 : i32
    %86 = arith.index_cast %c2_i32 : i32 to index
    %c0_33 = arith.constant 0 : index
    %c0_34 = arith.constant 0 : index
    %87 = vector.load %arg11[%86, %c0_33, %c0_34] : memref<8x8x512xf32, #tpu.memory_space<vmem>>, vector<1x8x512xf32>
    %88 = vector.shape_cast %87 : vector<1x8x512xf32> to vector<8x512xf32>
    %cst_35 = arith.constant dense<0.000000e+00> : vector<8x512xf32>
    %89 = tpu.matmul %81, %13, %cst_35 {dimension_numbers = #tpu.dot_dimension_numbers<[1], [0], [0], [1], [0, 0, 1, 1], [], []>} : vector<8x128xbf16>, vector<128x512xbf16>, vector<8x512xf32> -> vector<8x512xf32>
    %90 = arith.addf %88, %89 : vector<8x512xf32>
    %91 = vector.extract_strided_slice %90 {offsets = [0, 0], sizes = [8, 128], strides = [1, 1]} : vector<8x512xf32> to vector<8x128xf32>
    %92 = arith.negf %91 : vector<8x128xf32>
    %93 = math.exp %92 : vector<8x128xf32>
    %cst_36 = arith.constant 1.000000e+00 : f32
    %94 = vector.broadcast %cst_36 : f32 to vector<8x128xf32>
    %95 = arith.addf %94, %93 : vector<8x128xf32>
    %96 = arith.divf %94, %95 : vector<8x128xf32>
    %97 = vector.extract_strided_slice %90 {offsets = [0, 128], sizes = [8, 128], strides = [1, 1]} : vector<8x512xf32> to vector<8x128xf32>
    %98 = arith.negf %97 : vector<8x128xf32>
    %99 = math.exp %98 : vector<8x128xf32>
    %cst_37 = arith.constant 1.000000e+00 : f32
    %100 = vector.broadcast %cst_37 : f32 to vector<8x128xf32>
    %101 = arith.addf %100, %99 : vector<8x128xf32>
    %102 = arith.divf %100, %101 : vector<8x128xf32>
    %103 = vector.extract_strided_slice %90 {offsets = [0, 256], sizes = [8, 128], strides = [1, 1]} : vector<8x512xf32> to vector<8x128xf32>
    %104 = math.tanh %103 : vector<8x128xf32>
    %105 = vector.extract_strided_slice %90 {offsets = [0, 384], sizes = [8, 128], strides = [1, 1]} : vector<8x512xf32> to vector<8x128xf32>
    %106 = arith.negf %105 : vector<8x128xf32>
    %107 = math.exp %106 : vector<8x128xf32>
    %cst_38 = arith.constant 1.000000e+00 : f32
    %108 = vector.broadcast %cst_38 : f32 to vector<8x128xf32>
    %109 = arith.addf %108, %107 : vector<8x128xf32>
    %110 = arith.divf %108, %109 : vector<8x128xf32>
    %111 = arith.mulf %102, %78 : vector<8x128xf32>
    %112 = arith.mulf %96, %104 : vector<8x128xf32>
    %113 = arith.addf %111, %112 : vector<8x128xf32>
    %114 = math.tanh %113 : vector<8x128xf32>
    %115 = arith.mulf %110, %114 : vector<8x128xf32>
    %116 = arith.truncf %115 : vector<8x128xf32> to vector<8x128xbf16>
    %117 = arith.index_cast %c2_i32 : i32 to index
    %c0_39 = arith.constant 0 : index
    %c0_40 = arith.constant 0 : index
    %118 = vector.load %arg8[%117, %c0_39, %c0_40] : memref<8x8x128xbf16, #tpu.memory_space<vmem>>, vector<1x8x128xbf16>
    %119 = vector.shape_cast %118 : vector<1x8x128xbf16> to vector<8x128xbf16>
    %120 = vector.shape_cast %116 : vector<8x128xbf16> to vector<1x8x128xbf16>
    tpu.vector_store %arg8[%117, %c0_39, %c0_40], %120 {strides = array<i32>} : memref<8x8x128xbf16, #tpu.memory_space<vmem>>, vector<1x8x128xbf16>,
    %c3_i32 = arith.constant 3 : i32
    %121 = arith.index_cast %c3_i32 : i32 to index
    %c0_41 = arith.constant 0 : index
    %c0_42 = arith.constant 0 : index
    %122 = vector.load %arg11[%121, %c0_41, %c0_42] : memref<8x8x512xf32, #tpu.memory_space<vmem>>, vector<1x8x512xf32>
    %123 = vector.shape_cast %122 : vector<1x8x512xf32> to vector<8x512xf32>
    %cst_43 = arith.constant dense<0.000000e+00> : vector<8x512xf32>
    %124 = tpu.matmul %116, %13, %cst_43 {dimension_numbers = #tpu.dot_dimension_numbers<[1], [0], [0], [1], [0, 0, 1, 1], [], []>} : vector<8x128xbf16>, vector<128x512xbf16>, vector<8x512xf32> -> vector<8x512xf32>
    %125 = arith.addf %123, %124 : vector<8x512xf32>
    %126 = vector.extract_strided_slice %125 {offsets = [0, 0], sizes = [8, 128], strides = [1, 1]} : vector<8x512xf32> to vector<8x128xf32>
    %127 = arith.negf %126 : vector<8x128xf32>
    %128 = math.exp %127 : vector<8x128xf32>
    %cst_44 = arith.constant 1.000000e+00 : f32
    %129 = vector.broadcast %cst_44 : f32 to vector<8x128xf32>
    %130 = arith.addf %129, %128 : vector<8x128xf32>
    %131 = arith.divf %129, %130 : vector<8x128xf32>
    %132 = vector.extract_strided_slice %125 {offsets = [0, 128], sizes = [8, 128], strides = [1, 1]} : vector<8x512xf32> to vector<8x128xf32>
    %133 = arith.negf %132 : vector<8x128xf32>
    %134 = math.exp %133 : vector<8x128xf32>
    %cst_45 = arith.constant 1.000000e+00 : f32
    %135 = vector.broadcast %cst_45 : f32 to vector<8x128xf32>
    %136 = arith.addf %135, %134 : vector<8x128xf32>
    %137 = arith.divf %135, %136 : vector<8x128xf32>
    %138 = vector.extract_strided_slice %125 {offsets = [0, 256], sizes = [8, 128], strides = [1, 1]} : vector<8x512xf32> to vector<8x128xf32>
    %139 = math.tanh %138 : vector<8x128xf32>
    %140 = vector.extract_strided_slice %125 {offsets = [0, 384], sizes = [8, 128], strides = [1, 1]} : vector<8x512xf32> to vector<8x128xf32>
    %141 = arith.negf %140 : vector<8x128xf32>
    %142 = math.exp %141 : vector<8x128xf32>
    %cst_46 = arith.constant 1.000000e+00 : f32
    %143 = vector.broadcast %cst_46 : f32 to vector<8x128xf32>
    %144 = arith.addf %143, %142 : vector<8x128xf32>
    %145 = arith.divf %143, %144 : vector<8x128xf32>
    %146 = arith.mulf %137, %113 : vector<8x128xf32>
    %147 = arith.mulf %131, %139 : vector<8x128xf32>
    %148 = arith.addf %146, %147 : vector<8x128xf32>
    %149 = math.tanh %148 : vector<8x128xf32>
    %150 = arith.mulf %145, %149 : vector<8x128xf32>
    %151 = arith.truncf %150 : vector<8x128xf32> to vector<8x128xbf16>
    %152 = arith.index_cast %c3_i32 : i32 to index
    %c0_47 = arith.constant 0 : index
    %c0_48 = arith.constant 0 : index
    %153 = vector.load %arg8[%152, %c0_47, %c0_48] : memref<8x8x128xbf16, #tpu.memory_space<vmem>>, vector<1x8x128xbf16>
    %154 = vector.shape_cast %153 : vector<1x8x128xbf16> to vector<8x128xbf16>
    %155 = vector.shape_cast %151 : vector<8x128xbf16> to vector<1x8x128xbf16>
    tpu.vector_store %arg8[%152, %c0_47, %c0_48], %155 {strides = array<i32>} : memref<8x8x128xbf16, #tpu.memory_space<vmem>>, vector<1x8x128xbf16>,
    %c4_i32 = arith.constant 4 : i32
    %156 = arith.index_cast %c4_i32 : i32 to index
    %c0_49 = arith.constant 0 : index
    %c0_50 = arith.constant 0 : index
    %157 = vector.load %arg11[%156, %c0_49, %c0_50] : memref<8x8x512xf32, #tpu.memory_space<vmem>>, vector<1x8x512xf32>
    %158 = vector.shape_cast %157 : vector<1x8x512xf32> to vector<8x512xf32>
    %cst_51 = arith.constant dense<0.000000e+00> : vector<8x512xf32>
    %159 = tpu.matmul %151, %13, %cst_51 {dimension_numbers = #tpu.dot_dimension_numbers<[1], [0], [0], [1], [0, 0, 1, 1], [], []>} : vector<8x128xbf16>, vector<128x512xbf16>, vector<8x512xf32> -> vector<8x512xf32>
    %160 = arith.addf %158, %159 : vector<8x512xf32>
    %161 = vector.extract_strided_slice %160 {offsets = [0, 0], sizes = [8, 128], strides = [1, 1]} : vector<8x512xf32> to vector<8x128xf32>
    %162 = arith.negf %161 : vector<8x128xf32>
    %163 = math.exp %162 : vector<8x128xf32>
    %cst_52 = arith.constant 1.000000e+00 : f32
    %164 = vector.broadcast %cst_52 : f32 to vector<8x128xf32>
    %165 = arith.addf %164, %163 : vector<8x128xf32>
    %166 = arith.divf %164, %165 : vector<8x128xf32>
    %167 = vector.extract_strided_slice %160 {offsets = [0, 128], sizes = [8, 128], strides = [1, 1]} : vector<8x512xf32> to vector<8x128xf32>
    %168 = arith.negf %167 : vector<8x128xf32>
    %169 = math.exp %168 : vector<8x128xf32>
    %cst_53 = arith.constant 1.000000e+00 : f32
    %170 = vector.broadcast %cst_53 : f32 to vector<8x128xf32>
    %171 = arith.addf %170, %169 : vector<8x128xf32>
    %172 = arith.divf %170, %171 : vector<8x128xf32>
    %173 = vector.extract_strided_slice %160 {offsets = [0, 256], sizes = [8, 128], strides = [1, 1]} : vector<8x512xf32> to vector<8x128xf32>
    %174 = math.tanh %173 : vector<8x128xf32>
    %175 = vector.extract_strided_slice %160 {offsets = [0, 384], sizes = [8, 128], strides = [1, 1]} : vector<8x512xf32> to vector<8x128xf32>
    %176 = arith.negf %175 : vector<8x128xf32>
    %177 = math.exp %176 : vector<8x128xf32>
    %cst_54 = arith.constant 1.000000e+00 : f32
    %178 = vector.broadcast %cst_54 : f32 to vector<8x128xf32>
    %179 = arith.addf %178, %177 : vector<8x128xf32>
    %180 = arith.divf %178, %179 : vector<8x128xf32>
    %181 = arith.mulf %172, %148 : vector<8x128xf32>
    %182 = arith.mulf %166, %174 : vector<8x128xf32>
    %183 = arith.addf %181, %182 : vector<8x128xf32>
    %184 = math.tanh %183 : vector<8x128xf32>
    %185 = arith.mulf %180, %184 : vector<8x128xf32>
    %186 = arith.truncf %185 : vector<8x128xf32> to vector<8x128xbf16>
    %187 = arith.index_cast %c4_i32 : i32 to index
    %c0_55 = arith.constant 0 : index
    %c0_56 = arith.constant 0 : index
    %188 = vector.load %arg8[%187, %c0_55, %c0_56] : memref<8x8x128xbf16, #tpu.memory_space<vmem>>, vector<1x8x128xbf16>
    %189 = vector.shape_cast %188 : vector<1x8x128xbf16> to vector<8x128xbf16>
    %190 = vector.shape_cast %186 : vector<8x128xbf16> to vector<1x8x128xbf16>
    tpu.vector_store %arg8[%187, %c0_55, %c0_56], %190 {strides = array<i32>} : memref<8x8x128xbf16, #tpu.memory_space<vmem>>, vector<1x8x128xbf16>,
    %c5_i32 = arith.constant 5 : i32
    %191 = arith.index_cast %c5_i32 : i32 to index
    %c0_57 = arith.constant 0 : index
    %c0_58 = arith.constant 0 : index
    %192 = vector.load %arg11[%191, %c0_57, %c0_58] : memref<8x8x512xf32, #tpu.memory_space<vmem>>, vector<1x8x512xf32>
    %193 = vector.shape_cast %192 : vector<1x8x512xf32> to vector<8x512xf32>
    %cst_59 = arith.constant dense<0.000000e+00> : vector<8x512xf32>
    %194 = tpu.matmul %186, %13, %cst_59 {dimension_numbers = #tpu.dot_dimension_numbers<[1], [0], [0], [1], [0, 0, 1, 1], [], []>} : vector<8x128xbf16>, vector<128x512xbf16>, vector<8x512xf32> -> vector<8x512xf32>
    %195 = arith.addf %193, %194 : vector<8x512xf32>
    %196 = vector.extract_strided_slice %195 {offsets = [0, 0], sizes = [8, 128], strides = [1, 1]} : vector<8x512xf32> to vector<8x128xf32>
    %197 = arith.negf %196 : vector<8x128xf32>
    %198 = math.exp %197 : vector<8x128xf32>
    %cst_60 = arith.constant 1.000000e+00 : f32
    %199 = vector.broadcast %cst_60 : f32 to vector<8x128xf32>
    %200 = arith.addf %199, %198 : vector<8x128xf32>
    %201 = arith.divf %199, %200 : vector<8x128xf32>
    %202 = vector.extract_strided_slice %195 {offsets = [0, 128], sizes = [8, 128], strides = [1, 1]} : vector<8x512xf32> to vector<8x128xf32>
    %203 = arith.negf %202 : vector<8x128xf32>
    %204 = math.exp %203 : vector<8x128xf32>
    %cst_61 = arith.constant 1.000000e+00 : f32
    %205 = vector.broadcast %cst_61 : f32 to vector<8x128xf32>
    %206 = arith.addf %205, %204 : vector<8x128xf32>
    %207 = arith.divf %205, %206 : vector<8x128xf32>
    %208 = vector.extract_strided_slice %195 {offsets = [0, 256], sizes = [8, 128], strides = [1, 1]} : vector<8x512xf32> to vector<8x128xf32>
    %209 = math.tanh %208 : vector<8x128xf32>
    %210 = vector.extract_strided_slice %195 {offsets = [0, 384], sizes = [8, 128], strides = [1, 1]} : vector<8x512xf32> to vector<8x128xf32>
    %211 = arith.negf %210 : vector<8x128xf32>
    %212 = math.exp %211 : vector<8x128xf32>
    %cst_62 = arith.constant 1.000000e+00 : f32
    %213 = vector.broadcast %cst_62 : f32 to vector<8x128xf32>
    %214 = arith.addf %213, %212 : vector<8x128xf32>
    %215 = arith.divf %213, %214 : vector<8x128xf32>
    %216 = arith.mulf %207, %183 : vector<8x128xf32>
    %217 = arith.mulf %201, %209 : vector<8x128xf32>
    %218 = arith.addf %216, %217 : vector<8x128xf32>
    %219 = math.tanh %218 : vector<8x128xf32>
    %220 = arith.mulf %215, %219 : vector<8x128xf32>
    %221 = arith.truncf %220 : vector<8x128xf32> to vector<8x128xbf16>
    %222 = arith.index_cast %c5_i32 : i32 to index
    %c0_63 = arith.constant 0 : index
    %c0_64 = arith.constant 0 : index
    %223 = vector.load %arg8[%222, %c0_63, %c0_64] : memref<8x8x128xbf16, #tpu.memory_space<vmem>>, vector<1x8x128xbf16>
    %224 = vector.shape_cast %223 : vector<1x8x128xbf16> to vector<8x128xbf16>
    %225 = vector.shape_cast %221 : vector<8x128xbf16> to vector<1x8x128xbf16>
    tpu.vector_store %arg8[%222, %c0_63, %c0_64], %225 {strides = array<i32>} : memref<8x8x128xbf16, #tpu.memory_space<vmem>>, vector<1x8x128xbf16>,
    %c6_i32 = arith.constant 6 : i32
    %226 = arith.index_cast %c6_i32 : i32 to index
    %c0_65 = arith.constant 0 : index
    %c0_66 = arith.constant 0 : index
    %227 = vector.load %arg11[%226, %c0_65, %c0_66] : memref<8x8x512xf32, #tpu.memory_space<vmem>>, vector<1x8x512xf32>
    %228 = vector.shape_cast %227 : vector<1x8x512xf32> to vector<8x512xf32>
    %cst_67 = arith.constant dense<0.000000e+00> : vector<8x512xf32>
    %229 = tpu.matmul %221, %13, %cst_67 {dimension_numbers = #tpu.dot_dimension_numbers<[1], [0], [0], [1], [0, 0, 1, 1], [], []>} : vector<8x128xbf16>, vector<128x512xbf16>, vector<8x512xf32> -> vector<8x512xf32>
    %230 = arith.addf %228, %229 : vector<8x512xf32>
    %231 = vector.extract_strided_slice %230 {offsets = [0, 0], sizes = [8, 128], strides = [1, 1]} : vector<8x512xf32> to vector<8x128xf32>
    %232 = arith.negf %231 : vector<8x128xf32>
    %233 = math.exp %232 : vector<8x128xf32>
    %cst_68 = arith.constant 1.000000e+00 : f32
    %234 = vector.broadcast %cst_68 : f32 to vector<8x128xf32>
    %235 = arith.addf %234, %233 : vector<8x128xf32>
    %236 = arith.divf %234, %235 : vector<8x128xf32>
    %237 = vector.extract_strided_slice %230 {offsets = [0, 128], sizes = [8, 128], strides = [1, 1]} : vector<8x512xf32> to vector<8x128xf32>
    %238 = arith.negf %237 : vector<8x128xf32>
    %239 = math.exp %238 : vector<8x128xf32>
    %cst_69 = arith.constant 1.000000e+00 : f32
    %240 = vector.broadcast %cst_69 : f32 to vector<8x128xf32>
    %241 = arith.addf %240, %239 : vector<8x128xf32>
    %242 = arith.divf %240, %241 : vector<8x128xf32>
    %243 = vector.extract_strided_slice %230 {offsets = [0, 256], sizes = [8, 128], strides = [1, 1]} : vector<8x512xf32> to vector<8x128xf32>
    %244 = math.tanh %243 : vector<8x128xf32>
    %245 = vector.extract_strided_slice %230 {offsets = [0, 384], sizes = [8, 128], strides = [1, 1]} : vector<8x512xf32> to vector<8x128xf32>
    %246 = arith.negf %245 : vector<8x128xf32>
    %247 = math.exp %246 : vector<8x128xf32>
    %cst_70 = arith.constant 1.000000e+00 : f32
    %248 = vector.broadcast %cst_70 : f32 to vector<8x128xf32>
    %249 = arith.addf %248, %247 : vector<8x128xf32>
    %250 = arith.divf %248, %249 : vector<8x128xf32>
    %251 = arith.mulf %242, %218 : vector<8x128xf32>
    %252 = arith.mulf %236, %244 : vector<8x128xf32>
    %253 = arith.addf %251, %252 : vector<8x128xf32>
    %254 = math.tanh %253 : vector<8x128xf32>
    %255 = arith.mulf %250, %254 : vector<8x128xf32>
    %256 = arith.truncf %255 : vector<8x128xf32> to vector<8x128xbf16>
    %257 = arith.index_cast %c6_i32 : i32 to index
    %c0_71 = arith.constant 0 : index
    %c0_72 = arith.constant 0 : index
    %258 = vector.load %arg8[%257, %c0_71, %c0_72] : memref<8x8x128xbf16, #tpu.memory_space<vmem>>, vector<1x8x128xbf16>
    %259 = vector.shape_cast %258 : vector<1x8x128xbf16> to vector<8x128xbf16>
    %260 = vector.shape_cast %256 : vector<8x128xbf16> to vector<1x8x128xbf16>
    tpu.vector_store %arg8[%257, %c0_71, %c0_72], %260 {strides = array<i32>} : memref<8x8x128xbf16, #tpu.memory_space<vmem>>, vector<1x8x128xbf16>,
    %c7_i32 = arith.constant 7 : i32
    %261 = arith.index_cast %c7_i32 : i32 to index
    %c0_73 = arith.constant 0 : index
    %c0_74 = arith.constant 0 : index
    %262 = vector.load %arg11[%261, %c0_73, %c0_74] : memref<8x8x512xf32, #tpu.memory_space<vmem>>, vector<1x8x512xf32>
    %263 = vector.shape_cast %262 : vector<1x8x512xf32> to vector<8x512xf32>
    %cst_75 = arith.constant dense<0.000000e+00> : vector<8x512xf32>
    %264 = tpu.matmul %256, %13, %cst_75 {dimension_numbers = #tpu.dot_dimension_numbers<[1], [0], [0], [1], [0, 0, 1, 1], [], []>} : vector<8x128xbf16>, vector<128x512xbf16>, vector<8x512xf32> -> vector<8x512xf32>
    %265 = arith.addf %263, %264 : vector<8x512xf32>
    %266 = vector.extract_strided_slice %265 {offsets = [0, 0], sizes = [8, 128], strides = [1, 1]} : vector<8x512xf32> to vector<8x128xf32>
    %267 = arith.negf %266 : vector<8x128xf32>
    %268 = math.exp %267 : vector<8x128xf32>
    %cst_76 = arith.constant 1.000000e+00 : f32
    %269 = vector.broadcast %cst_76 : f32 to vector<8x128xf32>
    %270 = arith.addf %269, %268 : vector<8x128xf32>
    %271 = arith.divf %269, %270 : vector<8x128xf32>
    %272 = vector.extract_strided_slice %265 {offsets = [0, 128], sizes = [8, 128], strides = [1, 1]} : vector<8x512xf32> to vector<8x128xf32>
    %273 = arith.negf %272 : vector<8x128xf32>
    %274 = math.exp %273 : vector<8x128xf32>
    %cst_77 = arith.constant 1.000000e+00 : f32
    %275 = vector.broadcast %cst_77 : f32 to vector<8x128xf32>
    %276 = arith.addf %275, %274 : vector<8x128xf32>
    %277 = arith.divf %275, %276 : vector<8x128xf32>
    %278 = vector.extract_strided_slice %265 {offsets = [0, 256], sizes = [8, 128], strides = [1, 1]} : vector<8x512xf32> to vector<8x128xf32>
    %279 = math.tanh %278 : vector<8x128xf32>
    %280 = vector.extract_strided_slice %265 {offsets = [0, 384], sizes = [8, 128], strides = [1, 1]} : vector<8x512xf32> to vector<8x128xf32>
    %281 = arith.negf %280 : vector<8x128xf32>
    %282 = math.exp %281 : vector<8x128xf32>
    %cst_78 = arith.constant 1.000000e+00 : f32
    %283 = vector.broadcast %cst_78 : f32 to vector<8x128xf32>
    %284 = arith.addf %283, %282 : vector<8x128xf32>
    %285 = arith.divf %283, %284 : vector<8x128xf32>
    %286 = arith.mulf %277, %253 : vector<8x128xf32>
    %287 = arith.mulf %271, %279 : vector<8x128xf32>
    %288 = arith.addf %286, %287 : vector<8x128xf32>
    %289 = math.tanh %288 : vector<8x128xf32>
    %290 = arith.mulf %285, %289 : vector<8x128xf32>
    %291 = arith.truncf %290 : vector<8x128xf32> to vector<8x128xbf16>
    %292 = arith.index_cast %c7_i32 : i32 to index
    %c0_79 = arith.constant 0 : index
    %c0_80 = arith.constant 0 : index
    %293 = vector.load %arg8[%292, %c0_79, %c0_80] : memref<8x8x128xbf16, #tpu.memory_space<vmem>>, vector<1x8x128xbf16>
    %294 = vector.shape_cast %293 : vector<1x8x128xbf16> to vector<8x128xbf16>
    %295 = vector.shape_cast %291 : vector<8x128xbf16> to vector<1x8x128xbf16>
    tpu.vector_store %arg8[%292, %c0_79, %c0_80], %295 {strides = array<i32>} : memref<8x8x128xbf16, #tpu.memory_space<vmem>>, vector<1x8x128xbf16>,
    %c8_i32 = arith.constant 8 : i32
    %c0_81 = arith.constant 0 : index
    %c0_82 = arith.constant 0 : index
    %296 = vector.load %arg12[%c0_81, %c0_82] : memref<8x128xbf16, #tpu.memory_space<vmem>>, vector<8x128xbf16>
    tpu.vector_store %arg12[%c0_81, %c0_82], %291 {strides = array<i32>} : memref<8x128xbf16, #tpu.memory_space<vmem>>, vector<8x128xbf16>,
    %c0_83 = arith.constant 0 : index
    %c0_84 = arith.constant 0 : index
    %297 = vector.load %arg13[%c0_83, %c0_84] : memref<8x128xf32, #tpu.memory_space<vmem>>, vector<8x128xf32>
    tpu.vector_store %arg13[%c0_83, %c0_84], %288 {strides = array<i32>} : memref<8x128xf32, #tpu.memory_space<vmem>>, vector<8x128xf32>,
    %c0_i32_85 = arith.constant 0 : i32
    %298 = arith.cmpi eq, %arg1, %c0_i32_85 : i32
    %299 = arith.extui %298 : i1 to i32
    %c0_i32_86 = arith.constant 0 : i32
    %300 = arith.cmpi ne, %299, %c0_i32_86 : i32
    scf.if %300 {
      %c0_87 = arith.constant 0 : index
      %c0_88 = arith.constant 0 : index
      %301 = vector.load %arg12[%c0_87, %c0_88] : memref<8x128xbf16, #tpu.memory_space<vmem>>, vector<8x128xbf16>
      %302 = arith.extf %301 : vector<8x128xbf16> to vector<8x128xf32>
      %c0_89 = arith.constant 0 : index
      %c0_90 = arith.constant 0 : index
      %303 = vector.load %arg9[%c0_89, %c0_90] : memref<8x128xf32, #tpu.memory_space<vmem>>, vector<8x128xf32>
      tpu.vector_store %arg9[%c0_89, %c0_90], %302 {strides = array<i32>} : memref<8x128xf32, #tpu.memory_space<vmem>>, vector<8x128xf32>,
      %c0_91 = arith.constant 0 : index
      %c0_92 = arith.constant 0 : index
      %304 = vector.load %arg13[%c0_91, %c0_92] : memref<8x128xf32, #tpu.memory_space<vmem>>, vector<8x128xf32>
      %c0_93 = arith.constant 0 : index
      %c0_94 = arith.constant 0 : index
      %305 = vector.load %arg10[%c0_93, %c0_94] : memref<8x128xf32, #tpu.memory_space<vmem>>, vector<8x128xf32>
      tpu.vector_store %arg10[%c0_93, %c0_94], %304 {strides = array<i32>} : memref<8x128xf32, #tpu.memory_space<vmem>>, vector<8x128xf32>,
    } else {
    }
    return
  }
  func.func @transform_0(%arg0: i32, %arg1: i32) -> (i32, i32, i32) {
    %c0_i32 = arith.constant 0 : i32
    %c0_i32_0 = arith.constant 0 : i32
    return %arg1, %arg0, %c0_i32 : i32, i32, i32
  }
  func.func @transform_1(%arg0: i32, %arg1: i32) -> (i32, i32) {
    %c0_i32 = arith.constant 0 : i32
    %c0_i32_0 = arith.constant 0 : i32
    %c0_i32_1 = arith.constant 0 : i32
    return %c0_i32, %c0_i32_0 : i32, i32
  }
  func.func @transform_2(%arg0: i32, %arg1: i32) -> (i32, i32) {
    %c0_i32 = arith.constant 0 : i32
    %c0_i32_0 = arith.constant 0 : i32
    %c0_i32_1 = arith.constant 0 : i32
    return %c0_i32, %c0_i32_0 : i32, i32
  }
  func.func @transform_3(%arg0: i32, %arg1: i32) -> (i32, i32) {
    %c0_i32 = arith.constant 0 : i32
    %c0_i32_0 = arith.constant 0 : i32
    %c0_i32_1 = arith.constant 0 : i32
    return %c0_i32, %c0_i32_0 : i32, i32
  }
  func.func @transform_4(%arg0: i32, %arg1: i32) -> (i32, i32) {
    %c0_i32 = arith.constant 0 : i32
    %c0_i32_0 = arith.constant 0 : i32
    return %arg0, %c0_i32 : i32, i32
  }
  func.func @transform_5(%arg0: i32, %arg1: i32) -> (i32, i32) {
    %c0_i32 = arith.constant 0 : i32
    %c0_i32_0 = arith.constant 0 : i32
    return %arg0, %c0_i32 : i32, i32
  }
  func.func @transform_6(%arg0: i32, %arg1: i32) -> (i32, i32, i32) {
    %c0_i32 = arith.constant 0 : i32
    %c0_i32_0 = arith.constant 0 : i32
    return %arg1, %arg0, %c0_i32 : i32, i32, i32
  }
  func.func @transform_7(%arg0: i32, %arg1: i32) -> (i32, i32) {
    %c0_i32 = arith.constant 0 : i32
    %c0_i32_0 = arith.constant 0 : i32
    return %arg0, %c0_i32 : i32, i32
  }
  func.func @transform_8(%arg0: i32, %arg1: i32) -> (i32, i32) {
    %c0_i32 = arith.constant 0 : i32
    %c0_i32_0 = arith.constant 0 : i32
    return %arg0, %c0_i32 : i32, i32
  }
}

</mosaic_0001>

<llo_original>
// kernel: tpu_custom_call.1
$region0: #{tpu_custom_call.1}
  #allocation0 [shape = 'u32[]', space=smem, size = 0x4, offset = 0x4, fixed_abs, tag = 'smem constant byte address 0x4 - core index']
  #allocation1 [shape = 'u32[144,128]{1,0:T(1,128)}', space=vmem, size = 0x12000, scoped, tag = 'internal scratch']
  #allocation2 [shape = 'f32[8,8,512]{2,1,0:T(8,128)}', space=vmem, size = 0x20000, scoped, tag = 'scratch operand']
  #allocation3 [shape = 'bf16[8,128]{1,0:T(8,128)(2,1)}', space=vmem, size = 0x800, scoped, tag = 'scratch operand']
  #allocation4 [shape = 'f32[8,128]{1,0:T(8,128)}', space=vmem, size = 0x1000, scoped, tag = 'scratch operand']
  %s0 = inlined_call_operand.hbm [shape: f32[8,8,16], index: 0, kind: input, shape index: {}]
  %s1 = inlined_call_operand.hbm [shape: bf16[16,512], index: 1, kind: input, shape index: {}]
  %s2 = inlined_call_operand.hbm [shape: bf16[128,512], index: 2, kind: input, shape index: {}]
  %s3 = inlined_call_operand.hbm [shape: f32[1,512], index: 3, kind: input, shape index: {}]
  %s4 = inlined_call_operand.vmem [shape: f32[8,128], index: 4, kind: input, shape index: {}]
  %s5 = inlined_call_operand.vmem [shape: f32[8,128], index: 5, kind: input, shape index: {}]
  %s6 = inlined_call_operand.hbm [shape: bf16[8,8,128], index: 6, kind: output, shape index: {0}]
  %s7 = inlined_call_operand.hbm [shape: f32[8,128], index: 7, kind: output, shape index: {1}]
  %s8 = inlined_call_operand.hbm [shape: f32[8,128], index: 8, kind: output, shape index: {2}]
  %9 = xla_tuple %s6, %s7, %s8
  %s10 = sld [smem:[#allocation0]]
  $region74: #{tpu_custom_call.1} parent=0
    _
  %s12 = ssub.s32 1, %s10
  %s13 = scalar_select 0, %s12, %s10
  $region1: #{tpu_custom_call.1} parent=0
    #allocation5 [shape = 'u8[32768]{0}', space=vmem, size = 0x8000, scoped, tag = 'input window, operand 0, single buffered']
    #allocation6 [shape = 's32[1]{0}', space=sflag, size = 0x4, scoped, tag = 'scoped memory for tpu_custom_call.1']
    #allocation7 [shape = 's32[1]{0}', space=sflag, size = 0x4, scoped, tag = 'scoped memory for tpu_custom_call.1']
    #allocation8 [shape = 'u8[16384]{0}', space=vmem, size = 0x4000, scoped, tag = 'input window, operand 1, single buffered']
    #allocation9 [shape = 's32[1]{0}', space=sflag, size = 0x4, scoped, tag = 'scoped memory for tpu_custom_call.1']
    #allocation10 [shape = 'u8[131072]{0}', space=vmem, size = 0x20000, scoped, tag = 'input window, operand 2, single buffered']
    #allocation11 [shape = 'u8[2048]{0}', space=vmem, size = 0x800, scoped, tag = 'input window, operand 3, single buffered']
    #allocation12 [shape = 's32[1]{0}', space=sflag, size = 0x4, scoped, tag = 'scoped memory for tpu_custom_call.1']
    #allocation13 [shape = 'u8[16384]{0}', space=vmem, size = 0x4000, scoped, tag = 'output window, operand 0, single buffered']
    #allocation14 [shape = 'u8[4096]{0}', space=vmem, size = 0x1000, scoped, tag = 'output window, operand 1, single buffered']
    #allocation15 [shape = 's32[1]{0}', space=sflag, size = 0x4, scoped, tag = 'scoped memory for tpu_custom_call.1']
    #allocation16 [shape = 'u8[4096]{0}', space=vmem, size = 0x1000, scoped, tag = 'output window, operand 2, single buffered']
    %14 = vsyncpa [#allocation6], 0
    %15 = vsyncpa [#allocation9], 0
    %16 = vsyncpa [#allocation12], 0
    %17 = vsyncpa [#allocation7], 0
    %18 = vsyncpa [#allocation15], 0
    // Predicated region
    $region2: #{tpu_custom_call.1} parent=1 // pred_check
      _
    $region3: #{tpu_custom_call.1} parent=1 // pred_check_branch
      %20 = sbr.rel (0) target = $region5
    $region4: #{tpu_custom_call.1} parent=1 // pred_region
      %s22 = ssub.s32 1024, 1024
      %23 = vsyncadd [#allocation6], %s22
      %s24 = sshll.u32 [#allocation5], 4
      %s25 = int_to_ptr.vmem [resolvable:$true] %s24
      %30 = dma.hbm_to_vmem [thread:$0]  %s0, 1024, %s25, [#allocation6], 128, 128, 8
    $region5: #{tpu_custom_call.1} parent=1 // pred_fallthru
      _
    // Predicated region
    $region6: #{tpu_custom_call.1} parent=1 // pred_check
      _
    $region7: #{tpu_custom_call.1} parent=1 // pred_check_branch
      %32 = sbr.rel (0) target = $region9
    $region8: #{tpu_custom_call.1} parent=1 // pred_region
      %s34 = ssub.s32 512, 512
      %35 = vsyncadd [#allocation9], %s34
      %s36 = sshll.u32 [#allocation8], 4
      %s37 = int_to_ptr.vmem [resolvable:$true] %s36
      %42 = dma.hbm_to_vmem [thread:$0]  %s1, 512, %s37, [#allocation9], 256, 256, 16
    $region9: #{tpu_custom_call.1} parent=1 // pred_fallthru
      _
    // Predicated region
    $region10: #{tpu_custom_call.1} parent=1 // pred_check
      _
    $region11: #{tpu_custom_call.1} parent=1 // pred_check_branch
      %44 = sbr.rel (0) target = $region13
    $region12: #{tpu_custom_call.1} parent=1 // pred_region
      %s46 = ssub.s32 4096, 4096
      %47 = vsyncadd [#allocation9], %s46
      %s48 = sshll.u32 [#allocation10], 4
      %s49 = int_to_ptr.vmem [resolvable:$true] %s48
      %54 = dma.hbm_to_vmem [thread:$0]  %s2, 4096, %s49, [#allocation9], 256, 256, 16
    $region13: #{tpu_custom_call.1} parent=1 // pred_fallthru
      _
    // Predicated region
    $region14: #{tpu_custom_call.1} parent=1 // pred_check
      _
    $region15: #{tpu_custom_call.1} parent=1 // pred_check_branch
      %56 = sbr.rel (0) target = $region17
    $region16: #{tpu_custom_call.1} parent=1 // pred_region
      %s58 = ssub.s32 64, 64
      %59 = vsyncadd [#allocation12], %s58
      %s61 = sshll.u32 [#allocation11], 4
      %s62 = int_to_ptr.vmem [resolvable:$true] %s61
      %64 = dma.hbm_to_vmem [thread:$0]  %s3, 64, %s62, [#allocation12]
    $region17: #{tpu_custom_call.1} parent=1 // pred_fallthru
      _
    // Predicated region
    $region18: #{tpu_custom_call.1} parent=1 // pred_check
      _
    $region19: #{tpu_custom_call.1} parent=1 // pred_check_branch
      %66 = sbr.rel (0) target = $region21
    $region20: #{tpu_custom_call.1} parent=1 // pred_region
      _
    $region21: #{tpu_custom_call.1} parent=1 // pred_fallthru
      _
    // Predicated region
    $region22: #{tpu_custom_call.1} parent=1 // pred_check
      _
    $region23: #{tpu_custom_call.1} parent=1 // pred_check_branch
      %68 = sbr.rel (0) target = $region25
    $region24: #{tpu_custom_call.1} parent=1 // pred_region
      _
    $region25: #{tpu_custom_call.1} parent=1 // pred_fallthru
      _
    // Predicated region
    $region26: #{tpu_custom_call.1} parent=1 // pred_check
      _
    $region27: #{tpu_custom_call.1} parent=1 // pred_check_branch
      %70 = sbr.rel (0) target = $region29
    $region28: #{tpu_custom_call.1} parent=1 // pred_region
      %71 = dma.done [#allocation6], 1024
    $region29: #{tpu_custom_call.1} parent=1 // pred_fallthru
      _
    // Predicated region
    $region30: #{tpu_custom_call.1} parent=1 // pred_check
      _
    $region31: #{tpu_custom_call.1} parent=1 // pred_check_branch
      %73 = sbr.rel (0) target = $region33
    $region32: #{tpu_custom_call.1} parent=1 // pred_region
      %74 = dma.done [#allocation9], 512
    $region33: #{tpu_custom_call.1} parent=1 // pred_fallthru
      _
    // Predicated region
    $region34: #{tpu_custom_call.1} parent=1 // pred_check
      _
    $region35: #{tpu_custom_call.1} parent=1 // pred_check_branch
      %76 = sbr.rel (0) target = $region37
    $region36: #{tpu_custom_call.1} parent=1 // pred_region
      %77 = dma.done [#allocation9], 4096
    $region37: #{tpu_custom_call.1} parent=1 // pred_fallthru
      _
    // Predicated region
    $region38: #{tpu_custom_call.1} parent=1 // pred_check
      _
    $region39: #{tpu_custom_call.1} parent=1 // pred_check_branch
      %79 = sbr.rel (0) target = $region41
    $region40: #{tpu_custom_call.1} parent=1 // pred_region
      %80 = dma.done [#allocation12], 64
    $region41: #{tpu_custom_call.1} parent=1 // pred_fallthru
      _
    %p82 = scmp.eq.s32.totalorder 0, 0
    // Predicated region
    $region42: #{tpu_custom_call.1} parent=1 // pred_check
      %p83 = pneg %p82
    $region43: #{tpu_custom_call.1} parent=1 // pred_check_branch
      %85 = sbr.rel (%p83) target = $region45
    $region44: #{tpu_custom_call.1} parent=1 // pred_region
      %v86 = vld [vmem:[%s4] sm:$0xff]
      %v87 = vpack.c.bf16 %v86, %v86
      %88 = vst [vmem:[#allocation3] sm:$0xf] %v87
      %v89 = vld [vmem:[%s5] sm:$0xff]
      %90 = vst [vmem:[#allocation4] sm:$0xff] %v89
    $region45: #{tpu_custom_call.1} parent=1 // pred_fallthru
      _
    %v91 = vld [vmem:[#allocation5] sm:$0xff]
    %v92 = vld [vmem:[#allocation5 + $0x8] sm:$0xff]
    %v93 = vld [vmem:[#allocation5 + $0x10] sm:$0xff]
    %v94 = vld [vmem:[#allocation5 + $0x18] sm:$0xff]
    %v95 = vld [vmem:[#allocation5 + $0x20] sm:$0xff]
    %v96 = vld [vmem:[#allocation5 + $0x28] sm:$0xff]
    %v97 = vld [vmem:[#allocation5 + $0x30] sm:$0xff]
    %v98 = vld [vmem:[#allocation5 + $0x38] sm:$0xff]
    %v99 = vpack.c.bf16 %v91, %v91
    %v100 = vpack.c.bf16 %v92, %v92
    %v101 = vpack.c.bf16 %v93, %v93
    %v102 = vpack.c.bf16 %v94, %v94
    %v103 = vpack.c.bf16 %v95, %v95
    %v104 = vpack.c.bf16 %v96, %v96
    %v105 = vpack.c.bf16 %v97, %v97
    %v106 = vpack.c.bf16 %v98, %v98
    %v107 = vld [vmem:[#allocation8] sm:$0xff]
    %v108 = vld [vmem:[#allocation8 + $0x8] sm:$0xff]
    %v109 = vld [vmem:[#allocation8 + $0x10] sm:$0xff]
    %v110 = vld [vmem:[#allocation8 + $0x18] sm:$0xff]
    %v111 = vld [vmem:[#allocation11] sm:$0xf]
    %v113 = vlaneseq
    %v114 = vshrl.u32 %v113, 7
    %v115 = vsub.s32 0, %v114
    %v116 = vrot.slane %v111, %v115
    %v117 = vlaneseq
    %v118 = vshrl.u32 %v117, 7
    %v119 = vsub.s32 1, %v118
    %v120 = vrot.slane %v111, %v119
    %v121 = vlaneseq
    %v122 = vshrl.u32 %v121, 7
    %v123 = vsub.s32 2, %v122
    %v124 = vrot.slane %v111, %v123
    %v125 = vlaneseq
    %v126 = vshrl.u32 %v125, 7
    %v127 = vsub.s32 3, %v126
    %v128 = vrot.slane %v111, %v127
    %v141 = vunpack.c.l.b16 %v99
    %v142 = vunpack.c.l.b16 %v100
    %v143 = vunpack.c.l.b16 %v101
    %v144 = vunpack.c.l.b16 %v102
    %v145 = vunpack.c.l.b16 %v103
    %v146 = vunpack.c.l.b16 %v104
    %v147 = vunpack.c.l.b16 %v105
    %v148 = vunpack.c.l.b16 %v106
    %v149 = vpack.c.b16 %v142, %v141
    %v150 = vpack.c.b16 %v144, %v143
    %v151 = vpack.c.b16 %v146, %v145
    %v152 = vpack.c.b16 %v148, %v147
    %v157 = vunpack.c.l.b16 %v107
    %v158 = vunpack.c.h.b16 %v107
    %v159 = vunpack.c.l.b16 %v108
    %v160 = vunpack.c.h.b16 %v108
    %v161 = vunpack.c.l.b16 %v109
    %v162 = vunpack.c.h.b16 %v109
    %v163 = vunpack.c.l.b16 %v110
    %v164 = vunpack.c.h.b16 %v110
    %v165 = vpack.c.b16 %v161, %v157
    %v166 = vpack.c.b16 %v162, %v158
    %v167 = vpack.c.b16 %v163, %v159
    %v168 = vpack.c.b16 %v164, %v160
    %vm173 = vcmask 130048
    %v175 = vsel %vm173, %v149, 0
    %v178 = vsel %vm173, %v150, 0
    %v181 = vsel %vm173, %v151, 0
    %v184 = vsel %vm173, %v152, 0
    %186 = vmatprep.subr.bf16.mxu0 %v166
    %187 = vmatpush1.bf16.msra.mxu0 %v165
    %188 = vmatprep.subr.bf16.mxu0 0
    %189 = vmatpush1.bf16.msra.mxu0 0
    %190 = vmatprep.subr.bf16.mxu0 0
    %191 = vmatpush1.bf16.msra.mxu0 0
    %192 = vmatprep.subr.bf16.mxu0 0
    %193 = vmatpush1.bf16.msra.mxu0 0
    %194 = vmatprep.subr.bf16.mxu0 0
    %195 = vmatpush1.bf16.msra.mxu0 0
    %196 = vmatprep.subr.bf16.mxu0 0
    %197 = vmatpush1.bf16.msra.mxu0 0
    %198 = vmatprep.subr.bf16.mxu0 0
    %199 = vmatpush1.bf16.msra.mxu0 0
    %200 = vmatprep.subr.bf16.mxu0 0
    %201 = vmatpush1.bf16.msra.mxu0 0
    %202 = vmatprep.subr.bf16.mxu0 0
    %203 = vmatpush1.bf16.msra.mxu0 0
    %204 = vmatprep.subr.bf16.mxu0 0
    %205 = vmatpush1.bf16.msra.mxu0 0
    %206 = vmatprep.subr.bf16.mxu0 0
    %207 = vmatpush1.bf16.msra.mxu0 0
    %208 = vmatprep.subr.bf16.mxu0 0
    %209 = vmatpush1.bf16.msra.mxu0 0
    %210 = vmatprep.subr.bf16.mxu0 0
    %211 = vmatpush1.bf16.msra.mxu0 0
    %212 = vmatprep.subr.bf16.mxu0 0
    %213 = vmatpush1.bf16.msra.mxu0 0
    %214 = vmatprep.subr.bf16.mxu0 0
    %215 = vmatpush1.bf16.msra.mxu0 0
    %216 = vmatprep.subr.bf16.mxu0 0
    %217 = vmatpush1.bf16.msra.mxu0 0
    %218 = vmatprep.mubr.bf16.mxu0 0
    %219 = vmatmul.mubr.bf16.gmra.mrb[0].mxu0 %v175
    %v220 = vpop.f32.mrb[0].mxu0
    %v221 = vadd.f32 %v116, %v220
    %v222 = vpop.f32.mrb[0].mxu0
    %v223 = vadd.f32 %v120, %v222
    %v224 = vpop.f32.mrb[0].mxu0
    %v225 = vadd.f32 %v116, %v224
    %v226 = vpop.f32.mrb[0].mxu0
    %v227 = vadd.f32 %v120, %v226
    %228 = vmatprep.mubr.bf16.mxu0 0
    %229 = vmatmul.mubr.bf16.gmra.mrb[0].mxu0 %v178
    %v230 = vpop.f32.mrb[0].mxu0
    %v231 = vadd.f32 %v116, %v230
    %v232 = vpop.f32.mrb[0].mxu0
    %v233 = vadd.f32 %v120, %v232
    %v234 = vpop.f32.mrb[0].mxu0
    %v235 = vadd.f32 %v116, %v234
    %v236 = vpop.f32.mrb[0].mxu0
    %v237 = vadd.f32 %v120, %v236
    %238 = vmatprep.mubr.bf16.mxu0 0
    %239 = vmatmul.mubr.bf16.gmra.mrb[0].mxu0 %v181
    %v240 = vpop.f32.mrb[0].mxu0
    %v241 = vadd.f32 %v116, %v240
    %v242 = vpop.f32.mrb[0].mxu0
    %v243 = vadd.f32 %v120, %v242
    %v244 = vpop.f32.mrb[0].mxu0
    %v245 = vadd.f32 %v116, %v244
    %v246 = vpop.f32.mrb[0].mxu0
    %v247 = vadd.f32 %v120, %v246
    %248 = vmatprep.mubr.bf16.mxu0 0
    %249 = vmatmul.mubr.bf16.gmra.mrb[0].mxu0 %v184
    %v250 = vpop.f32.mrb[0].mxu0
    %v251 = vadd.f32 %v116, %v250
    %v252 = vpop.f32.mrb[0].mxu0
    %v253 = vadd.f32 %v120, %v252
    %v254 = vpop.f32.mrb[0].mxu0
    %v255 = vadd.f32 %v116, %v254
    %v256 = vpop.f32.mrb[0].mxu0
    %v257 = vadd.f32 %v120, %v256
    %258 = vdwg.mxu0
    %259 = vmatprep.subr.bf16.mxu0 %v168
    %260 = vmatpush1.bf16.msra.mxu0 %v167
    %261 = vmatprep.subr.bf16.mxu0 0
    %262 = vmatpush1.bf16.msra.mxu0 0
    %263 = vmatprep.subr.bf16.mxu0 0
    %264 = vmatpush1.bf16.msra.mxu0 0
    %265 = vmatprep.subr.bf16.mxu0 0
    %266 = vmatpush1.bf16.msra.mxu0 0
    %267 = vmatprep.subr.bf16.mxu0 0
    %268 = vmatpush1.bf16.msra.mxu0 0
    %269 = vmatprep.subr.bf16.mxu0 0
    %270 = vmatpush1.bf16.msra.mxu0 0
    %271 = vmatprep.subr.bf16.mxu0 0
    %272 = vmatpush1.bf16.msra.mxu0 0
    %273 = vmatprep.subr.bf16.mxu0 0
    %274 = vmatpush1.bf16.msra.mxu0 0
    %275 = vmatprep.subr.bf16.mxu0 0
    %276 = vmatpush1.bf16.msra.mxu0 0
    %277 = vmatprep.subr.bf16.mxu0 0
    %278 = vmatpush1.bf16.msra.mxu0 0
    %279 = vmatprep.subr.bf16.mxu0 0
    %280 = vmatpush1.bf16.msra.mxu0 0
    %281 = vmatprep.subr.bf16.mxu0 0
    %282 = vmatpush1.bf16.msra.mxu0 0
    %283 = vmatprep.subr.bf16.mxu0 0
    %284 = vmatpush1.bf16.msra.mxu0 0
    %285 = vmatprep.subr.bf16.mxu0 0
    %286 = vmatpush1.bf16.msra.mxu0 0
    %287 = vmatprep.subr.bf16.mxu0 0
    %288 = vmatpush1.bf16.msra.mxu0 0
    %289 = vmatprep.subr.bf16.mxu0 0
    %290 = vmatpush1.bf16.msra.mxu0 0
    %291 = vmatprep.mubr.bf16.mxu0 0
    %292 = vmatmul.mubr.bf16.gmra.mrb[0].mxu0 %v175
    %v293 = vpop.f32.mrb[0].mxu0
    %v294 = vadd.f32 %v124, %v293
    %v295 = vpop.f32.mrb[0].mxu0
    %v296 = vadd.f32 %v128, %v295
    %v297 = vpop.f32.mrb[0].mxu0
    %v298 = vadd.f32 %v124, %v297
    %v299 = vpop.f32.mrb[0].mxu0
    %v300 = vadd.f32 %v128, %v299
    %301 = vmatprep.mubr.bf16.mxu0 0
    %302 = vmatmul.mubr.bf16.gmra.mrb[0].mxu0 %v178
    %v303 = vpop.f32.mrb[0].mxu0
    %v304 = vadd.f32 %v124, %v303
    %v305 = vpop.f32.mrb[0].mxu0
    %v306 = vadd.f32 %v128, %v305
    %v307 = vpop.f32.mrb[0].mxu0
    %v308 = vadd.f32 %v124, %v307
    %v309 = vpop.f32.mrb[0].mxu0
    %v310 = vadd.f32 %v128, %v309
    %311 = vmatprep.mubr.bf16.mxu0 0
    %312 = vmatmul.mubr.bf16.gmra.mrb[0].mxu0 %v181
    %v313 = vpop.f32.mrb[0].mxu0
    %v314 = vadd.f32 %v124, %v313
    %v315 = vpop.f32.mrb[0].mxu0
    %v316 = vadd.f32 %v128, %v315
    %v317 = vpop.f32.mrb[0].mxu0
    %v318 = vadd.f32 %v124, %v317
    %v319 = vpop.f32.mrb[0].mxu0
    %v320 = vadd.f32 %v128, %v319
    %321 = vmatprep.mubr.bf16.mxu0 0
    %322 = vmatmul.mubr.bf16.gmra.mrb[0].mxu0 %v184
    %v323 = vpop.f32.mrb[0].mxu0
    %v324 = vadd.f32 %v124, %v323
    %v325 = vpop.f32.mrb[0].mxu0
    %v326 = vadd.f32 %v128, %v325
    %v327 = vpop.f32.mrb[0].mxu0
    %v328 = vadd.f32 %v124, %v327
    %v329 = vpop.f32.mrb[0].mxu0
    %v330 = vadd.f32 %v128, %v329
    %331 = vdwg.mxu0
    %332 = vst [vmem:[#allocation2] sm:$0xff] %v221
    %333 = vst [vmem:[#allocation2 + $0x8] sm:$0xff] %v223
    %334 = vst [vmem:[#allocation2 + $0x10] sm:$0xff] %v294
    %335 = vst [vmem:[#allocation2 + $0x18] sm:$0xff] %v296
    %336 = vst [vmem:[#allocation2 + $0x20] sm:$0xff] %v225
    %337 = vst [vmem:[#allocation2 + $0x28] sm:$0xff] %v227
    %338 = vst [vmem:[#allocation2 + $0x30] sm:$0xff] %v298
    %339 = vst [vmem:[#allocation2 + $0x38] sm:$0xff] %v300
    %340 = vst [vmem:[#allocation2 + $0x40] sm:$0xff] %v231
    %341 = vst [vmem:[#allocation2 + $0x48] sm:$0xff] %v233
    %342 = vst [vmem:[#allocation2 + $0x50] sm:$0xff] %v304
    %343 = vst [vmem:[#allocation2 + $0x58] sm:$0xff] %v306
    %344 = vst [vmem:[#allocation2 + $0x60] sm:$0xff] %v235
    %345 = vst [vmem:[#allocation2 + $0x68] sm:$0xff] %v237
    %346 = vst [vmem:[#allocation2 + $0x70] sm:$0xff] %v308
    %347 = vst [vmem:[#allocation2 + $0x78] sm:$0xff] %v310
    %348 = vst [vmem:[#allocation2 + $0x80] sm:$0xff] %v241
    %349 = vst [vmem:[#allocation2 + $0x88] sm:$0xff] %v243
    %350 = vst [vmem:[#allocation2 + $0x90] sm:$0xff] %v314
    %351 = vst [vmem:[#allocation2 + $0x98] sm:$0xff] %v316
    %352 = vst [vmem:[#allocation2 + $0xa0] sm:$0xff] %v245
    %353 = vst [vmem:[#allocation2 + $0xa8] sm:$0xff] %v247
    %354 = vst [vmem:[#allocation2 + $0xb0] sm:$0xff] %v318
    %355 = vst [vmem:[#allocation2 + $0xb8] sm:$0xff] %v320
    %356 = vst [vmem:[#allocation2 + $0xc0] sm:$0xff] %v251
    %357 = vst [vmem:[#allocation2 + $0xc8] sm:$0xff] %v253
    %358 = vst [vmem:[#allocation2 + $0xd0] sm:$0xff] %v324
    %359 = vst [vmem:[#allocation2 + $0xd8] sm:$0xff] %v326
    %360 = vst [vmem:[#allocation2 + $0xe0] sm:$0xff] %v255
    %361 = vst [vmem:[#allocation2 + $0xe8] sm:$0xff] %v257
    %362 = vst [vmem:[#allocation2 + $0xf0] sm:$0xff] %v328
    %363 = vst [vmem:[#allocation2 + $0xf8] sm:$0xff] %v330
    %v364 = vld [vmem:[#allocation10] sm:$0xff]
    %v365 = vld [vmem:[#allocation10 + $0x8] sm:$0xff]
    %v366 = vld [vmem:[#allocation10 + $0x10] sm:$0xff]
    %v367 = vld [vmem:[#allocation10 + $0x18] sm:$0xff]
    %v368 = vld [vmem:[#allocation10 + $0x20] sm:$0xff]
    %v369 = vld [vmem:[#allocation10 + $0x28] sm:$0xff]
    %v370 = vld [vmem:[#allocation10 + $0x30] sm:$0xff]
    %v371 = vld [vmem:[#allocation10 + $0x38] sm:$0xff]
    %v372 = vld [vmem:[#allocation10 + $0x40] sm:$0xff]
    %v373 = vld [vmem:[#allocation10 + $0x48] sm:$0xff]
    %v374 = vld [vmem:[#allocation10 + $0x50] sm:$0xff]
    %v375 = vld [vmem:[#allocation10 + $0x58] sm:$0xff]
    %v376 = vld [vmem:[#allocation10 + $0x60] sm:$0xff]
    %v377 = vld [vmem:[#allocation10 + $0x68] sm:$0xff]
    %v378 = vld [vmem:[#allocation10 + $0x70] sm:$0xff]
    %v379 = vld [vmem:[#allocation10 + $0x78] sm:$0xff]
    %v380 = vld [vmem:[#allocation10 + $0x80] sm:$0xff]
    %v381 = vld [vmem:[#allocation10 + $0x88] sm:$0xff]
    %v382 = vld [vmem:[#allocation10 + $0x90] sm:$0xff]
    %v383 = vld [vmem:[#allocation10 + $0x98] sm:$0xff]
    %v384 = vld [vmem:[#allocation10 + $0xa0] sm:$0xff]
    %v385 = vld [vmem:[#allocation10 + $0xa8] sm:$0xff]
    %v386 = vld [vmem:[#allocation10 + $0xb0] sm:$0xff]
    %v387 = vld [vmem:[#allocation10 + $0xb8] sm:$0xff]
    %v388 = vld [vmem:[#allocation10 + $0xc0] sm:$0xff]
    %v389 = vld [vmem:[#allocation10 + $0xc8] sm:$0xff]
    %v390 = vld [vmem:[#allocation10 + $0xd0] sm:$0xff]
    %v391 = vld [vmem:[#allocation10 + $0xd8] sm:$0xff]
    %v392 = vld [vmem:[#allocation10 + $0xe0] sm:$0xff]
    %v393 = vld [vmem:[#allocation10 + $0xe8] sm:$0xff]
    %v394 = vld [vmem:[#allocation10 + $0xf0] sm:$0xff]
    %v395 = vld [vmem:[#allocation10 + $0xf8] sm:$0xff]
    %v396 = vld [vmem:[#allocation3] sm:$0xf]
    %v397 = vld [vmem:[#allocation4] sm:$0xff]
    %v398 = vld [vmem:[#allocation2] sm:$0xff]
    %v399 = vld [vmem:[#allocation2 + $0x8] sm:$0xff]
    %v400 = vld [vmem:[#allocation2 + $0x10] sm:$0xff]
    %v401 = vld [vmem:[#allocation2 + $0x18] sm:$0xff]
    %v434 = vunpack.c.l.b16 %v364
    %v435 = vunpack.c.h.b16 %v364
    %v436 = vunpack.c.l.b16 %v365
    %v437 = vunpack.c.h.b16 %v365
    %v438 = vunpack.c.l.b16 %v366
    %v439 = vunpack.c.h.b16 %v366
    %v440 = vunpack.c.l.b16 %v367
    %v441 = vunpack.c.h.b16 %v367
    %v442 = vunpack.c.l.b16 %v368
    %v443 = vunpack.c.h.b16 %v368
    %v444 = vunpack.c.l.b16 %v369
    %v445 = vunpack.c.h.b16 %v369
    %v446 = vunpack.c.l.b16 %v370
    %v447 = vunpack.c.h.b16 %v370
    %v448 = vunpack.c.l.b16 %v371
    %v449 = vunpack.c.h.b16 %v371
    %v450 = vunpack.c.l.b16 %v372
    %v451 = vunpack.c.h.b16 %v372
    %v452 = vunpack.c.l.b16 %v373
    %v453 = vunpack.c.h.b16 %v373
    %v454 = vunpack.c.l.b16 %v374
    %v455 = vunpack.c.h.b16 %v374
    %v456 = vunpack.c.l.b16 %v375
    %v457 = vunpack.c.h.b16 %v375
    %v458 = vunpack.c.l.b16 %v376
    %v459 = vunpack.c.h.b16 %v376
    %v460 = vunpack.c.l.b16 %v377
    %v461 = vunpack.c.h.b16 %v377
    %v462 = vunpack.c.l.b16 %v378
    %v463 = vunpack.c.h.b16 %v378
    %v464 = vunpack.c.l.b16 %v379
    %v465 = vunpack.c.h.b16 %v379
    %v466 = vunpack.c.l.b16 %v380
    %v467 = vunpack.c.h.b16 %v380
    %v468 = vunpack.c.l.b16 %v381
    %v469 = vunpack.c.h.b16 %v381
    %v470 = vunpack.c.l.b16 %v382
    %v471 = vunpack.c.h.b16 %v382
    %v472 = vunpack.c.l.b16 %v383
    %v473 = vunpack.c.h.b16 %v383
    %v474 = vunpack.c.l.b16 %v384
    %v475 = vunpack.c.h.b16 %v384
    %v476 = vunpack.c.l.b16 %v385
    %v477 = vunpack.c.h.b16 %v385
    %v478 = vunpack.c.l.b16 %v386
    %v479 = vunpack.c.h.b16 %v386
    %v480 = vunpack.c.l.b16 %v387
    %v481 = vunpack.c.h.b16 %v387
    %v482 = vunpack.c.l.b16 %v388
    %v483 = vunpack.c.h.b16 %v388
    %v484 = vunpack.c.l.b16 %v389
    %v485 = vunpack.c.h.b16 %v389
    %v486 = vunpack.c.l.b16 %v390
    %v487 = vunpack.c.h.b16 %v390
    %v488 = vunpack.c.l.b16 %v391
    %v489 = vunpack.c.h.b16 %v391
    %v490 = vunpack.c.l.b16 %v392
    %v491 = vunpack.c.h.b16 %v392
    %v492 = vunpack.c.l.b16 %v393
    %v493 = vunpack.c.h.b16 %v393
    %v494 = vunpack.c.l.b16 %v394
    %v495 = vunpack.c.h.b16 %v394
    %v496 = vunpack.c.l.b16 %v395
    %v497 = vunpack.c.h.b16 %v395
    %v498 = vpack.c.b16 %v438, %v434
    %v499 = vpack.c.b16 %v439, %v435
    %v500 = vpack.c.b16 %v440, %v436
    %v501 = vpack.c.b16 %v441, %v437
    %v502 = vpack.c.b16 %v446, %v442
    %v503 = vpack.c.b16 %v447, %v443
    %v504 = vpack.c.b16 %v448, %v444
    %v505 = vpack.c.b16 %v449, %v445
    %v506 = vpack.c.b16 %v454, %v450
    %v507 = vpack.c.b16 %v455, %v451
    %v508 = vpack.c.b16 %v456, %v452
    %v509 = vpack.c.b16 %v457, %v453
    %v510 = vpack.c.b16 %v462, %v458
    %v511 = vpack.c.b16 %v463, %v459
    %v512 = vpack.c.b16 %v464, %v460
    %v513 = vpack.c.b16 %v465, %v461
    %v514 = vpack.c.b16 %v470, %v466
    %v515 = vpack.c.b16 %v471, %v467
    %v516 = vpack.c.b16 %v472, %v468
    %v517 = vpack.c.b16 %v473, %v469
    %v518 = vpack.c.b16 %v478, %v474
    %v519 = vpack.c.b16 %v479, %v475
    %v520 = vpack.c.b16 %v480, %v476
    %v521 = vpack.c.b16 %v481, %v477
    %v522 = vpack.c.b16 %v486, %v482
    %v523 = vpack.c.b16 %v487, %v483
    %v524 = vpack.c.b16 %v488, %v484
    %v525 = vpack.c.b16 %v489, %v485
    %v526 = vpack.c.b16 %v494, %v490
    %v527 = vpack.c.b16 %v495, %v491
    %v528 = vpack.c.b16 %v496, %v492
    %v529 = vpack.c.b16 %v497, %v493
    %562 = vmatprep.subr.bf16.mxu0 %v499
    %563 = vmatpush1.bf16.msra.mxu0 %v498
    %564 = vmatprep.subr.bf16.mxu0 %v503
    %565 = vmatpush1.bf16.msra.mxu0 %v502
    %566 = vmatprep.subr.bf16.mxu0 %v507
    %567 = vmatpush1.bf16.msra.mxu0 %v506
    %568 = vmatprep.subr.bf16.mxu0 %v511
    %569 = vmatpush1.bf16.msra.mxu0 %v510
    %570 = vmatprep.subr.bf16.mxu0 %v515
    %571 = vmatpush1.bf16.msra.mxu0 %v514
    %572 = vmatprep.subr.bf16.mxu0 %v519
    %573 = vmatpush1.bf16.msra.mxu0 %v518
    %574 = vmatprep.subr.bf16.mxu0 %v523
    %575 = vmatpush1.bf16.msra.mxu0 %v522
    %576 = vmatprep.subr.bf16.mxu0 %v527
    %577 = vmatpush1.bf16.msra.mxu0 %v526
    %578 = vmatprep.subr.bf16.mxu0 0
    %579 = vmatpush1.bf16.msra.mxu0 0
    %580 = vmatprep.subr.bf16.mxu0 0
    %581 = vmatpush1.bf16.msra.mxu0 0
    %582 = vmatprep.subr.bf16.mxu0 0
    %583 = vmatpush1.bf16.msra.mxu0 0
    %584 = vmatprep.subr.bf16.mxu0 0
    %585 = vmatpush1.bf16.msra.mxu0 0
    %586 = vmatprep.subr.bf16.mxu0 0
    %587 = vmatpush1.bf16.msra.mxu0 0
    %588 = vmatprep.subr.bf16.mxu0 0
    %589 = vmatpush1.bf16.msra.mxu0 0
    %590 = vmatprep.subr.bf16.mxu0 0
    %591 = vmatpush1.bf16.msra.mxu0 0
    %592 = vmatprep.subr.bf16.mxu0 0
    %593 = vmatpush1.bf16.msra.mxu0 0
    %594 = vmatprep.mubr.bf16.mxu0 0
    %595 = vmatmul.mubr.bf16.gmra.mrb[0].mxu0 %v396
    %v596 = vpop.f32.mrb[0].mxu0
    %v597 = vadd.f32 0.0, %v596
    %v598 = vpop.f32.mrb[0].mxu0
    %v599 = vadd.f32 0.0, %v598
    %v600 = vpop.f32.mrb[0].mxu0
    %v601 = vpop.f32.mrb[0].mxu0
    %602 = vdwg.mxu0
    %603 = vmatprep.subr.bf16.mxu0 %v501
    %604 = vmatpush1.bf16.msra.mxu0 %v500
    %605 = vmatprep.subr.bf16.mxu0 %v505
    %606 = vmatpush1.bf16.msra.mxu0 %v504
    %607 = vmatprep.subr.bf16.mxu0 %v509
    %608 = vmatpush1.bf16.msra.mxu0 %v508
    %609 = vmatprep.subr.bf16.mxu0 %v513
    %610 = vmatpush1.bf16.msra.mxu0 %v512
    %611 = vmatprep.subr.bf16.mxu0 %v517
    %612 = vmatpush1.bf16.msra.mxu0 %v516
    %613 = vmatprep.subr.bf16.mxu0 %v521
    %614 = vmatpush1.bf16.msra.mxu0 %v520
    %615 = vmatprep.subr.bf16.mxu0 %v525
    %616 = vmatpush1.bf16.msra.mxu0 %v524
    %617 = vmatprep.subr.bf16.mxu0 %v529
    %618 = vmatpush1.bf16.msra.mxu0 %v528
    %619 = vmatprep.subr.bf16.mxu0 0
    %620 = vmatpush1.bf16.msra.mxu0 0
    %621 = vmatprep.subr.bf16.mxu0 0
    %622 = vmatpush1.bf16.msra.mxu0 0
    %623 = vmatprep.subr.bf16.mxu0 0
    %624 = vmatpush1.bf16.msra.mxu0 0
    %625 = vmatprep.subr.bf16.mxu0 0
    %626 = vmatpush1.bf16.msra.mxu0 0
    %627 = vmatprep.subr.bf16.mxu0 0
    %628 = vmatpush1.bf16.msra.mxu0 0
    %629 = vmatprep.subr.bf16.mxu0 0
    %630 = vmatpush1.bf16.msra.mxu0 0
    %631 = vmatprep.subr.bf16.mxu0 0
    %632 = vmatpush1.bf16.msra.mxu0 0
    %633 = vmatprep.subr.bf16.mxu0 0
    %634 = vmatpush1.bf16.msra.mxu0 0
    %635 = vmatprep.mubr.bf16.mxu0 0
    %636 = vmatmul.mubr.bf16.gmra.mrb[0].mxu0 %v396
    %v637 = vpop.f32.mrb[0].mxu0
    %v638 = vadd.f32 0.0, %v637
    %v639 = vpop.f32.mrb[0].mxu0
    %v640 = vadd.f32 0.0, %v639
    %v641 = vpop.f32.mrb[0].mxu0
    %v642 = vpop.f32.mrb[0].mxu0
    %643 = vdwg.mxu0
    %v644 = vadd.f32 %v398, %v597
    %v645 = vadd.f32 %v399, %v599
    %v646 = vadd.f32 %v400, %v638
    %v647 = vadd.f32 %v401, %v640
    %v648 = vxor.u32 %v644, 2147483648
    %v649 = vmul.f32 %v648, 1.442695
    %v650 = vpow.pop %v649
    %v651 = vadd.f32 %v650, 1.0
    %v652 = vrcp.pop %v651
    %v653 = vmul.f32 1.0, %v652
    %v654 = vxor.u32 %v645, 2147483648
    %v655 = vmul.f32 %v654, 1.442695
    %v656 = vpow.pop %v655
    %v657 = vadd.f32 %v656, 1.0
    %v658 = vrcp.pop %v657
    %v659 = vmul.f32 1.0, %v658
    %v660 = vtanh.pop %v646
    %v661 = vxor.u32 %v647, 2147483648
    %v662 = vmul.f32 %v661, 1.442695
    %v663 = vpow.pop %v662
    %v664 = vadd.f32 %v663, 1.0
    %v665 = vrcp.pop %v664
    %v666 = vmul.f32 1.0, %v665
    %v667 = vmul.f32 %v659, %v397
    %v668 = vmul.f32 %v653, %v660
    %v669 = vadd.f32 %v667, %v668
    %v670 = vtanh.pop %v669
    %v671 = vmul.f32 %v666, %v670
    %v672 = vpack.c.bf16 %v671, %v671
    %673 = vst [vmem:[#allocation13] sm:$0xf] %v672
    %s674 = scalar_lea.vmem [#allocation2], 32
    %v675 = vld [vmem:[%s674] sm:$0xff]
    %v676 = vld [vmem:[%s674 + $0x8] sm:$0xff]
    %v677 = vld [vmem:[%s674 + $0x10] sm:$0xff]
    %v678 = vld [vmem:[%s674 + $0x18] sm:$0xff]
    %679 = vmatprep.subr.bf16.mxu0 %v499
    %680 = vmatpush1.bf16.msra.mxu0 %v498
    %681 = vmatprep.subr.bf16.mxu0 %v503
    %682 = vmatpush1.bf16.msra.mxu0 %v502
    %683 = vmatprep.subr.bf16.mxu0 %v507
    %684 = vmatpush1.bf16.msra.mxu0 %v506
    %685 = vmatprep.subr.bf16.mxu0 %v511
    %686 = vmatpush1.bf16.msra.mxu0 %v510
    %687 = vmatprep.subr.bf16.mxu0 %v515
    %688 = vmatpush1.bf16.msra.mxu0 %v514
    %689 = vmatprep.subr.bf16.mxu0 %v519
    %690 = vmatpush1.bf16.msra.mxu0 %v518
    %691 = vmatprep.subr.bf16.mxu0 %v523
    %692 = vmatpush1.bf16.msra.mxu0 %v522
    %693 = vmatprep.subr.bf16.mxu0 %v527
    %694 = vmatpush1.bf16.msra.mxu0 %v526
    %695 = vmatprep.subr.bf16.mxu0 0
    %696 = vmatpush1.bf16.msra.mxu0 0
    %697 = vmatprep.subr.bf16.mxu0 0
    %698 = vmatpush1.bf16.msra.mxu0 0
    %699 = vmatprep.subr.bf16.mxu0 0
    %700 = vmatpush1.bf16.msra.mxu0 0
    %701 = vmatprep.subr.bf16.mxu0 0
    %702 = vmatpush1.bf16.msra.mxu0 0
    %703 = vmatprep.subr.bf16.mxu0 0
    %704 = vmatpush1.bf16.msra.mxu0 0
    %705 = vmatprep.subr.bf16.mxu0 0
    %706 = vmatpush1.bf16.msra.mxu0 0
    %707 = vmatprep.subr.bf16.mxu0 0
    %708 = vmatpush1.bf16.msra.mxu0 0
    %709 = vmatprep.subr.bf16.mxu0 0
    %710 = vmatpush1.bf16.msra.mxu0 0
    %711 = vmatprep.mubr.bf16.mxu0 0
    %712 = vmatmul.mubr.bf16.gmra.mrb[0].mxu0 %v672
    %v713 = vpop.f32.mrb[0].mxu0
    %v714 = vadd.f32 0.0, %v713
    %v715 = vpop.f32.mrb[0].mxu0
    %v716 = vadd.f32 0.0, %v715
    %v717 = vpop.f32.mrb[0].mxu0
    %v718 = vpop.f32.mrb[0].mxu0
    %719 = vdwg.mxu0
    %720 = vmatprep.subr.bf16.mxu0 %v501
    %721 = vmatpush1.bf16.msra.mxu0 %v500
    %722 = vmatprep.subr.bf16.mxu0 %v505
    %723 = vmatpush1.bf16.msra.mxu0 %v504
    %724 = vmatprep.subr.bf16.mxu0 %v509
    %725 = vmatpush1.bf16.msra.mxu0 %v508
    %726 = vmatprep.subr.bf16.mxu0 %v513
    %727 = vmatpush1.bf16.msra.mxu0 %v512
    %728 = vmatprep.subr.bf16.mxu0 %v517
    %729 = vmatpush1.bf16.msra.mxu0 %v516
    %730 = vmatprep.subr.bf16.mxu0 %v521
    %731 = vmatpush1.bf16.msra.mxu0 %v520
    %732 = vmatprep.subr.bf16.mxu0 %v525
    %733 = vmatpush1.bf16.msra.mxu0 %v524
    %734 = vmatprep.subr.bf16.mxu0 %v529
    %735 = vmatpush1.bf16.msra.mxu0 %v528
    %736 = vmatprep.subr.bf16.mxu0 0
    %737 = vmatpush1.bf16.msra.mxu0 0
    %738 = vmatprep.subr.bf16.mxu0 0
    %739 = vmatpush1.bf16.msra.mxu0 0
    %740 = vmatprep.subr.bf16.mxu0 0
    %741 = vmatpush1.bf16.msra.mxu0 0
    %742 = vmatprep.subr.bf16.mxu0 0
    %743 = vmatpush1.bf16.msra.mxu0 0
    %744 = vmatprep.subr.bf16.mxu0 0
    %745 = vmatpush1.bf16.msra.mxu0 0
    %746 = vmatprep.subr.bf16.mxu0 0
    %747 = vmatpush1.bf16.msra.mxu0 0
    %748 = vmatprep.subr.bf16.mxu0 0
    %749 = vmatpush1.bf16.msra.mxu0 0
    %750 = vmatprep.subr.bf16.mxu0 0
    %751 = vmatpush1.bf16.msra.mxu0 0
    %752 = vmatprep.mubr.bf16.mxu0 0
    %753 = vmatmul.mubr.bf16.gmra.mrb[0].mxu0 %v672
    %v754 = vpop.f32.mrb[0].mxu0
    %v755 = vadd.f32 0.0, %v754
    %v756 = vpop.f32.mrb[0].mxu0
    %v757 = vadd.f32 0.0, %v756
    %v758 = vpop.f32.mrb[0].mxu0
    %v759 = vpop.f32.mrb[0].mxu0
    %760 = vdwg.mxu0
    %v761 = vadd.f32 %v675, %v714
    %v762 = vadd.f32 %v676, %v716
    %v763 = vadd.f32 %v677, %v755
    %v764 = vadd.f32 %v678, %v757
    %v765 = vxor.u32 %v761, 2147483648
    %v766 = vmul.f32 %v765, 1.442695
    %v767 = vpow.pop %v766
    %v768 = vadd.f32 %v767, 1.0
    %v769 = vrcp.pop %v768
    %v770 = vmul.f32 1.0, %v769
    %v771 = vxor.u32 %v762, 2147483648
    %v772 = vmul.f32 %v771, 1.442695
    %v773 = vpow.pop %v772
    %v774 = vadd.f32 %v773, 1.0
    %v775 = vrcp.pop %v774
    %v776 = vmul.f32 1.0, %v775
    %v777 = vtanh.pop %v763
    %v778 = vxor.u32 %v764, 2147483648
    %v779 = vmul.f32 %v778, 1.442695
    %v780 = vpow.pop %v779
    %v781 = vadd.f32 %v780, 1.0
    %v782 = vrcp.pop %v781
    %v783 = vmul.f32 1.0, %v782
    %v784 = vmul.f32 %v776, %v669
    %v785 = vmul.f32 %v770, %v777
    %v786 = vadd.f32 %v784, %v785
    %v787 = vtanh.pop %v786
    %v788 = vmul.f32 %v783, %v787
    %v789 = vpack.c.bf16 %v788, %v788
    %s790 = scalar_lea.vmem [#allocation13], 4
    %791 = vst [vmem:[%s790] sm:$0xf] %v789
    %s792 = scalar_lea.vmem [#allocation2], 64
    %v793 = vld [vmem:[%s792] sm:$0xff]
    %v794 = vld [vmem:[%s792 + $0x8] sm:$0xff]
    %v795 = vld [vmem:[%s792 + $0x10] sm:$0xff]
    %v796 = vld [vmem:[%s792 + $0x18] sm:$0xff]
    %797 = vmatprep.subr.bf16.mxu0 %v499
    %798 = vmatpush1.bf16.msra.mxu0 %v498
    %799 = vmatprep.subr.bf16.mxu0 %v503
    %800 = vmatpush1.bf16.msra.mxu0 %v502
    %801 = vmatprep.subr.bf16.mxu0 %v507
    %802 = vmatpush1.bf16.msra.mxu0 %v506
    %803 = vmatprep.subr.bf16.mxu0 %v511
    %804 = vmatpush1.bf16.msra.mxu0 %v510
    %805 = vmatprep.subr.bf16.mxu0 %v515
    %806 = vmatpush1.bf16.msra.mxu0 %v514
    %807 = vmatprep.subr.bf16.mxu0 %v519
    %808 = vmatpush1.bf16.msra.mxu0 %v518
    %809 = vmatprep.subr.bf16.mxu0 %v523
    %810 = vmatpush1.bf16.msra.mxu0 %v522
    %811 = vmatprep.subr.bf16.mxu0 %v527
    %812 = vmatpush1.bf16.msra.mxu0 %v526
    %813 = vmatprep.subr.bf16.mxu0 0
    %814 = vmatpush1.bf16.msra.mxu0 0
    %815 = vmatprep.subr.bf16.mxu0 0
    %816 = vmatpush1.bf16.msra.mxu0 0
    %817 = vmatprep.subr.bf16.mxu0 0
    %818 = vmatpush1.bf16.msra.mxu0 0
    %819 = vmatprep.subr.bf16.mxu0 0
    %820 = vmatpush1.bf16.msra.mxu0 0
    %821 = vmatprep.subr.bf16.mxu0 0
    %822 = vmatpush1.bf16.msra.mxu0 0
    %823 = vmatprep.subr.bf16.mxu0 0
    %824 = vmatpush1.bf16.msra.mxu0 0
    %825 = vmatprep.subr.bf16.mxu0 0
    %826 = vmatpush1.bf16.msra.mxu0 0
    %827 = vmatprep.subr.bf16.mxu0 0
    %828 = vmatpush1.bf16.msra.mxu0 0
    %829 = vmatprep.mubr.bf16.mxu0 0
    %830 = vmatmul.mubr.bf16.gmra.mrb[0].mxu0 %v789
    %v831 = vpop.f32.mrb[0].mxu0
    %v832 = vadd.f32 0.0, %v831
    %v833 = vpop.f32.mrb[0].mxu0
    %v834 = vadd.f32 0.0, %v833
    %v835 = vpop.f32.mrb[0].mxu0
    %v836 = vpop.f32.mrb[0].mxu0
    %837 = vdwg.mxu0
    %838 = vmatprep.subr.bf16.mxu0 %v501
    %839 = vmatpush1.bf16.msra.mxu0 %v500
    %840 = vmatprep.subr.bf16.mxu0 %v505
    %841 = vmatpush1.bf16.msra.mxu0 %v504
    %842 = vmatprep.subr.bf16.mxu0 %v509
    %843 = vmatpush1.bf16.msra.mxu0 %v508
    %844 = vmatprep.subr.bf16.mxu0 %v513
    %845 = vmatpush1.bf16.msra.mxu0 %v512
    %846 = vmatprep.subr.bf16.mxu0 %v517
    %847 = vmatpush1.bf16.msra.mxu0 %v516
    %848 = vmatprep.subr.bf16.mxu0 %v521
    %849 = vmatpush1.bf16.msra.mxu0 %v520
    %850 = vmatprep.subr.bf16.mxu0 %v525
    %851 = vmatpush1.bf16.msra.mxu0 %v524
    %852 = vmatprep.subr.bf16.mxu0 %v529
    %853 = vmatpush1.bf16.msra.mxu0 %v528
    %854 = vmatprep.subr.bf16.mxu0 0
    %855 = vmatpush1.bf16.msra.mxu0 0
    %856 = vmatprep.subr.bf16.mxu0 0
    %857 = vmatpush1.bf16.msra.mxu0 0
    %858 = vmatprep.subr.bf16.mxu0 0
    %859 = vmatpush1.bf16.msra.mxu0 0
    %860 = vmatprep.subr.bf16.mxu0 0
    %861 = vmatpush1.bf16.msra.mxu0 0
    %862 = vmatprep.subr.bf16.mxu0 0
    %863 = vmatpush1.bf16.msra.mxu0 0
    %864 = vmatprep.subr.bf16.mxu0 0
    %865 = vmatpush1.bf16.msra.mxu0 0
    %866 = vmatprep.subr.bf16.mxu0 0
    %867 = vmatpush1.bf16.msra.mxu0 0
    %868 = vmatprep.subr.bf16.mxu0 0
    %869 = vmatpush1.bf16.msra.mxu0 0
    %870 = vmatprep.mubr.bf16.mxu0 0
    %871 = vmatmul.mubr.bf16.gmra.mrb[0].mxu0 %v789
    %v872 = vpop.f32.mrb[0].mxu0
    %v873 = vadd.f32 0.0, %v872
    %v874 = vpop.f32.mrb[0].mxu0
    %v875 = vadd.f32 0.0, %v874
    %v876 = vpop.f32.mrb[0].mxu0
    %v877 = vpop.f32.mrb[0].mxu0
    %878 = vdwg.mxu0
    %v879 = vadd.f32 %v793, %v832
    %v880 = vadd.f32 %v794, %v834
    %v881 = vadd.f32 %v795, %v873
    %v882 = vadd.f32 %v796, %v875
    %v883 = vxor.u32 %v879, 2147483648
    %v884 = vmul.f32 %v883, 1.442695
    %v885 = vpow.pop %v884
    %v886 = vadd.f32 %v885, 1.0
    %v887 = vrcp.pop %v886
    %v888 = vmul.f32 1.0, %v887
    %v889 = vxor.u32 %v880, 2147483648
    %v890 = vmul.f32 %v889, 1.442695
    %v891 = vpow.pop %v890
    %v892 = vadd.f32 %v891, 1.0
    %v893 = vrcp.pop %v892
    %v894 = vmul.f32 1.0, %v893
    %v895 = vtanh.pop %v881
    %v896 = vxor.u32 %v882, 2147483648
    %v897 = vmul.f32 %v896, 1.442695
    %v898 = vpow.pop %v897
    %v899 = vadd.f32 %v898, 1.0
    %v900 = vrcp.pop %v899
    %v901 = vmul.f32 1.0, %v900
    %v902 = vmul.f32 %v894, %v786
    %v903 = vmul.f32 %v888, %v895
    %v904 = vadd.f32 %v902, %v903
    %v905 = vtanh.pop %v904
    %v906 = vmul.f32 %v901, %v905
    %v907 = vpack.c.bf16 %v906, %v906
    %s908 = scalar_lea.vmem [#allocation13], 8
    %909 = vst [vmem:[%s908] sm:$0xf] %v907
    %s910 = scalar_lea.vmem [#allocation2], 96
    %v911 = vld [vmem:[%s910] sm:$0xff]
    %v912 = vld [vmem:[%s910 + $0x8] sm:$0xff]
    %v913 = vld [vmem:[%s910 + $0x10] sm:$0xff]
    %v914 = vld [vmem:[%s910 + $0x18] sm:$0xff]
    %915 = vmatprep.subr.bf16.mxu0 %v499
    %916 = vmatpush1.bf16.msra.mxu0 %v498
    %917 = vmatprep.subr.bf16.mxu0 %v503
    %918 = vmatpush1.bf16.msra.mxu0 %v502
    %919 = vmatprep.subr.bf16.mxu0 %v507
    %920 = vmatpush1.bf16.msra.mxu0 %v506
    %921 = vmatprep.subr.bf16.mxu0 %v511
    %922 = vmatpush1.bf16.msra.mxu0 %v510
    %923 = vmatprep.subr.bf16.mxu0 %v515
    %924 = vmatpush1.bf16.msra.mxu0 %v514
    %925 = vmatprep.subr.bf16.mxu0 %v519
    %926 = vmatpush1.bf16.msra.mxu0 %v518
    %927 = vmatprep.subr.bf16.mxu0 %v523
    %928 = vmatpush1.bf16.msra.mxu0 %v522
    %929 = vmatprep.subr.bf16.mxu0 %v527
    %930 = vmatpush1.bf16.msra.mxu0 %v526
    %931 = vmatprep.subr.bf16.mxu0 0
    %932 = vmatpush1.bf16.msra.mxu0 0
    %933 = vmatprep.subr.bf16.mxu0 0
    %934 = vmatpush1.bf16.msra.mxu0 0
    %935 = vmatprep.subr.bf16.mxu0 0
    %936 = vmatpush1.bf16.msra.mxu0 0
    %937 = vmatprep.subr.bf16.mxu0 0
    %938 = vmatpush1.bf16.msra.mxu0 0
    %939 = vmatprep.subr.bf16.mxu0 0
    %940 = vmatpush1.bf16.msra.mxu0 0
    %941 = vmatprep.subr.bf16.mxu0 0
    %942 = vmatpush1.bf16.msra.mxu0 0
    %943 = vmatprep.subr.bf16.mxu0 0
    %944 = vmatpush1.bf16.msra.mxu0 0
    %945 = vmatprep.subr.bf16.mxu0 0
    %946 = vmatpush1.bf16.msra.mxu0 0
    %947 = vmatprep.mubr.bf16.mxu0 0
    %948 = vmatmul.mubr.bf16.gmra.mrb[0].mxu0 %v907
    %v949 = vpop.f32.mrb[0].mxu0
    %v950 = vadd.f32 0.0, %v949
    %v951 = vpop.f32.mrb[0].mxu0
    %v952 = vadd.f32 0.0, %v951
    %v953 = vpop.f32.mrb[0].mxu0
    %v954 = vpop.f32.mrb[0].mxu0
    %955 = vdwg.mxu0
    %956 = vmatprep.subr.bf16.mxu0 %v501
    %957 = vmatpush1.bf16.msra.mxu0 %v500
    %958 = vmatprep.subr.bf16.mxu0 %v505
    %959 = vmatpush1.bf16.msra.mxu0 %v504
    %960 = vmatprep.subr.bf16.mxu0 %v509
    %961 = vmatpush1.bf16.msra.mxu0 %v508
    %962 = vmatprep.subr.bf16.mxu0 %v513
    %963 = vmatpush1.bf16.msra.mxu0 %v512
    %964 = vmatprep.subr.bf16.mxu0 %v517
    %965 = vmatpush1.bf16.msra.mxu0 %v516
    %966 = vmatprep.subr.bf16.mxu0 %v521
    %967 = vmatpush1.bf16.msra.mxu0 %v520
    %968 = vmatprep.subr.bf16.mxu0 %v525
    %969 = vmatpush1.bf16.msra.mxu0 %v524
    %970 = vmatprep.subr.bf16.mxu0 %v529
    %971 = vmatpush1.bf16.msra.mxu0 %v528
    %972 = vmatprep.subr.bf16.mxu0 0
    %973 = vmatpush1.bf16.msra.mxu0 0
    %974 = vmatprep.subr.bf16.mxu0 0
    %975 = vmatpush1.bf16.msra.mxu0 0
    %976 = vmatprep.subr.bf16.mxu0 0
    %977 = vmatpush1.bf16.msra.mxu0 0
    %978 = vmatprep.subr.bf16.mxu0 0
    %979 = vmatpush1.bf16.msra.mxu0 0
    %980 = vmatprep.subr.bf16.mxu0 0
    %981 = vmatpush1.bf16.msra.mxu0 0
    %982 = vmatprep.subr.bf16.mxu0 0
    %983 = vmatpush1.bf16.msra.mxu0 0
    %984 = vmatprep.subr.bf16.mxu0 0
    %985 = vmatpush1.bf16.msra.mxu0 0
    %986 = vmatprep.subr.bf16.mxu0 0
    %987 = vmatpush1.bf16.msra.mxu0 0
    %988 = vmatprep.mubr.bf16.mxu0 0
    %989 = vmatmul.mubr.bf16.gmra.mrb[0].mxu0 %v907
    %v990 = vpop.f32.mrb[0].mxu0
    %v991 = vadd.f32 0.0, %v990
    %v992 = vpop.f32.mrb[0].mxu0
    %v993 = vadd.f32 0.0, %v992
    %v994 = vpop.f32.mrb[0].mxu0
    %v995 = vpop.f32.mrb[0].mxu0
    %996 = vdwg.mxu0
    %v997 = vadd.f32 %v911, %v950
    %v998 = vadd.f32 %v912, %v952
    %v999 = vadd.f32 %v913, %v991
    %v1000 = vadd.f32 %v914, %v993
    %v1001 = vxor.u32 %v997, 2147483648
    %v1002 = vmul.f32 %v1001, 1.442695
    %v1003 = vpow.pop %v1002
    %v1004 = vadd.f32 %v1003, 1.0
    %v1005 = vrcp.pop %v1004
    %v1006 = vmul.f32 1.0, %v1005
    %v1007 = vxor.u32 %v998, 2147483648
    %v1008 = vmul.f32 %v1007, 1.442695
    %v1009 = vpow.pop %v1008
    %v1010 = vadd.f32 %v1009, 1.0
    %v1011 = vrcp.pop %v1010
    %v1012 = vmul.f32 1.0, %v1011
    %v1013 = vtanh.pop %v999
    %v1014 = vxor.u32 %v1000, 2147483648
    %v1015 = vmul.f32 %v1014, 1.442695
    %v1016 = vpow.pop %v1015
    %v1017 = vadd.f32 %v1016, 1.0
    %v1018 = vrcp.pop %v1017
    %v1019 = vmul.f32 1.0, %v1018
    %v1020 = vmul.f32 %v1012, %v904
    %v1021 = vmul.f32 %v1006, %v1013
    %v1022 = vadd.f32 %v1020, %v1021
    %v1023 = vtanh.pop %v1022
    %v1024 = vmul.f32 %v1019, %v1023
    %v1025 = vpack.c.bf16 %v1024, %v1024
    %s1026 = scalar_lea.vmem [#allocation13], 12
    %1027 = vst [vmem:[%s1026] sm:$0xf] %v1025
    %s1028 = scalar_lea.vmem [#allocation2], 128
    %v1029 = vld [vmem:[%s1028] sm:$0xff]
    %v1030 = vld [vmem:[%s1028 + $0x8] sm:$0xff]
    %v1031 = vld [vmem:[%s1028 + $0x10] sm:$0xff]
    %v1032 = vld [vmem:[%s1028 + $0x18] sm:$0xff]
    %1033 = vmatprep.subr.bf16.mxu0 %v499
    %1034 = vmatpush1.bf16.msra.mxu0 %v498
    %1035 = vmatprep.subr.bf16.mxu0 %v503
    %1036 = vmatpush1.bf16.msra.mxu0 %v502
    %1037 = vmatprep.subr.bf16.mxu0 %v507
    %1038 = vmatpush1.bf16.msra.mxu0 %v506
    %1039 = vmatprep.subr.bf16.mxu0 %v511
    %1040 = vmatpush1.bf16.msra.mxu0 %v510
    %1041 = vmatprep.subr.bf16.mxu0 %v515
    %1042 = vmatpush1.bf16.msra.mxu0 %v514
    %1043 = vmatprep.subr.bf16.mxu0 %v519
    %1044 = vmatpush1.bf16.msra.mxu0 %v518
    %1045 = vmatprep.subr.bf16.mxu0 %v523
    %1046 = vmatpush1.bf16.msra.mxu0 %v522
    %1047 = vmatprep.subr.bf16.mxu0 %v527
    %1048 = vmatpush1.bf16.msra.mxu0 %v526
    %1049 = vmatprep.subr.bf16.mxu0 0
    %1050 = vmatpush1.bf16.msra.mxu0 0
    %1051 = vmatprep.subr.bf16.mxu0 0
    %1052 = vmatpush1.bf16.msra.mxu0 0
    %1053 = vmatprep.subr.bf16.mxu0 0
    %1054 = vmatpush1.bf16.msra.mxu0 0
    %1055 = vmatprep.subr.bf16.mxu0 0
    %1056 = vmatpush1.bf16.msra.mxu0 0
    %1057 = vmatprep.subr.bf16.mxu0 0
    %1058 = vmatpush1.bf16.msra.mxu0 0
    %1059 = vmatprep.subr.bf16.mxu0 0
    %1060 = vmatpush1.bf16.msra.mxu0 0
    %1061 = vmatprep.subr.bf16.mxu0 0
    %1062 = vmatpush1.bf16.msra.mxu0 0
    %1063 = vmatprep.subr.bf16.mxu0 0
    %1064 = vmatpush1.bf16.msra.mxu0 0
    %1065 = vmatprep.mubr.bf16.mxu0 0
    %1066 = vmatmul.mubr.bf16.gmra.mrb[0].mxu0 %v1025
    %v1067 = vpop.f32.mrb[0].mxu0
    %v1068 = vadd.f32 0.0, %v1067
    %v1069 = vpop.f32.mrb[0].mxu0
    %v1070 = vadd.f32 0.0, %v1069
    %v1071 = vpop.f32.mrb[0].mxu0
    %v1072 = vpop.f32.mrb[0].mxu0
    %1073 = vdwg.mxu0
    %1074 = vmatprep.subr.bf16.mxu0 %v501
    %1075 = vmatpush1.bf16.msra.mxu0 %v500
    %1076 = vmatprep.subr.bf16.mxu0 %v505
    %1077 = vmatpush1.bf16.msra.mxu0 %v504
    %1078 = vmatprep.subr.bf16.mxu0 %v509
    %1079 = vmatpush1.bf16.msra.mxu0 %v508
    %1080 = vmatprep.subr.bf16.mxu0 %v513
    %1081 = vmatpush1.bf16.msra.mxu0 %v512
    %1082 = vmatprep.subr.bf16.mxu0 %v517
    %1083 = vmatpush1.bf16.msra.mxu0 %v516
    %1084 = vmatprep.subr.bf16.mxu0 %v521
    %1085 = vmatpush1.bf16.msra.mxu0 %v520
    %1086 = vmatprep.subr.bf16.mxu0 %v525
    %1087 = vmatpush1.bf16.msra.mxu0 %v524
    %1088 = vmatprep.subr.bf16.mxu0 %v529
    %1089 = vmatpush1.bf16.msra.mxu0 %v528
    %1090 = vmatprep.subr.bf16.mxu0 0
    %1091 = vmatpush1.bf16.msra.mxu0 0
    %1092 = vmatprep.subr.bf16.mxu0 0
    %1093 = vmatpush1.bf16.msra.mxu0 0
    %1094 = vmatprep.subr.bf16.mxu0 0
    %1095 = vmatpush1.bf16.msra.mxu0 0
    %1096 = vmatprep.subr.bf16.mxu0 0
    %1097 = vmatpush1.bf16.msra.mxu0 0
    %1098 = vmatprep.subr.bf16.mxu0 0
    %1099 = vmatpush1.bf16.msra.mxu0 0
    %1100 = vmatprep.subr.bf16.mxu0 0
    %1101 = vmatpush1.bf16.msra.mxu0 0
    %1102 = vmatprep.subr.bf16.mxu0 0
    %1103 = vmatpush1.bf16.msra.mxu0 0
    %1104 = vmatprep.subr.bf16.mxu0 0
    %1105 = vmatpush1.bf16.msra.mxu0 0
    %1106 = vmatprep.mubr.bf16.mxu0 0
    %1107 = vmatmul.mubr.bf16.gmra.mrb[0].mxu0 %v1025
    %v1108 = vpop.f32.mrb[0].mxu0
    %v1109 = vadd.f32 0.0, %v1108
    %v1110 = vpop.f32.mrb[0].mxu0
    %v1111 = vadd.f32 0.0, %v1110
    %v1112 = vpop.f32.mrb[0].mxu0
    %v1113 = vpop.f32.mrb[0].mxu0
    %1114 = vdwg.mxu0
    %v1115 = vadd.f32 %v1029, %v1068
    %v1116 = vadd.f32 %v1030, %v1070
    %v1117 = vadd.f32 %v1031, %v1109
    %v1118 = vadd.f32 %v1032, %v1111
    %v1119 = vxor.u32 %v1115, 2147483648
    %v1120 = vmul.f32 %v1119, 1.442695
    %v1121 = vpow.pop %v1120
    %v1122 = vadd.f32 %v1121, 1.0
    %v1123 = vrcp.pop %v1122
    %v1124 = vmul.f32 1.0, %v1123
    %v1125 = vxor.u32 %v1116, 2147483648
    %v1126 = vmul.f32 %v1125, 1.442695
    %v1127 = vpow.pop %v1126
    %v1128 = vadd.f32 %v1127, 1.0
    %v1129 = vrcp.pop %v1128
    %v1130 = vmul.f32 1.0, %v1129
    %v1131 = vtanh.pop %v1117
    %v1132 = vxor.u32 %v1118, 2147483648
    %v1133 = vmul.f32 %v1132, 1.442695
    %v1134 = vpow.pop %v1133
    %v1135 = vadd.f32 %v1134, 1.0
    %v1136 = vrcp.pop %v1135
    %v1137 = vmul.f32 1.0, %v1136
    %v1138 = vmul.f32 %v1130, %v1022
    %v1139 = vmul.f32 %v1124, %v1131
    %v1140 = vadd.f32 %v1138, %v1139
    %v1141 = vtanh.pop %v1140
    %v1142 = vmul.f32 %v1137, %v1141
    %v1143 = vpack.c.bf16 %v1142, %v1142
    %s1144 = scalar_lea.vmem [#allocation13], 16
    %1145 = vst [vmem:[%s1144] sm:$0xf] %v1143
    %s1146 = scalar_lea.vmem [#allocation2], 160
    %v1147 = vld [vmem:[%s1146] sm:$0xff]
    %v1148 = vld [vmem:[%s1146 + $0x8] sm:$0xff]
    %v1149 = vld [vmem:[%s1146 + $0x10] sm:$0xff]
    %v1150 = vld [vmem:[%s1146 + $0x18] sm:$0xff]
    %1151 = vmatprep.subr.bf16.mxu0 %v499
    %1152 = vmatpush1.bf16.msra.mxu0 %v498
    %1153 = vmatprep.subr.bf16.mxu0 %v503
    %1154 = vmatpush1.bf16.msra.mxu0 %v502
    %1155 = vmatprep.subr.bf16.mxu0 %v507
    %1156 = vmatpush1.bf16.msra.mxu0 %v506
    %1157 = vmatprep.subr.bf16.mxu0 %v511
    %1158 = vmatpush1.bf16.msra.mxu0 %v510
    %1159 = vmatprep.subr.bf16.mxu0 %v515
    %1160 = vmatpush1.bf16.msra.mxu0 %v514
    %1161 = vmatprep.subr.bf16.mxu0 %v519
    %1162 = vmatpush1.bf16.msra.mxu0 %v518
    %1163 = vmatprep.subr.bf16.mxu0 %v523
    %1164 = vmatpush1.bf16.msra.mxu0 %v522
    %1165 = vmatprep.subr.bf16.mxu0 %v527
    %1166 = vmatpush1.bf16.msra.mxu0 %v526
    %1167 = vmatprep.subr.bf16.mxu0 0
    %1168 = vmatpush1.bf16.msra.mxu0 0
    %1169 = vmatprep.subr.bf16.mxu0 0
    %1170 = vmatpush1.bf16.msra.mxu0 0
    %1171 = vmatprep.subr.bf16.mxu0 0
    %1172 = vmatpush1.bf16.msra.mxu0 0
    %1173 = vmatprep.subr.bf16.mxu0 0
    %1174 = vmatpush1.bf16.msra.mxu0 0
    %1175 = vmatprep.subr.bf16.mxu0 0
    %1176 = vmatpush1.bf16.msra.mxu0 0
    %1177 = vmatprep.subr.bf16.mxu0 0
    %1178 = vmatpush1.bf16.msra.mxu0 0
    %1179 = vmatprep.subr.bf16.mxu0 0
    %1180 = vmatpush1.bf16.msra.mxu0 0
    %1181 = vmatprep.subr.bf16.mxu0 0
    %1182 = vmatpush1.bf16.msra.mxu0 0
    %1183 = vmatprep.mubr.bf16.mxu0 0
    %1184 = vmatmul.mubr.bf16.gmra.mrb[0].mxu0 %v1143
    %v1185 = vpop.f32.mrb[0].mxu0
    %v1186 = vadd.f32 0.0, %v1185
    %v1187 = vpop.f32.mrb[0].mxu0
    %v1188 = vadd.f32 0.0, %v1187
    %v1189 = vpop.f32.mrb[0].mxu0
    %v1190 = vpop.f32.mrb[0].mxu0
    %1191 = vdwg.mxu0
    %1192 = vmatprep.subr.bf16.mxu0 %v501
    %1193 = vmatpush1.bf16.msra.mxu0 %v500
    %1194 = vmatprep.subr.bf16.mxu0 %v505
    %1195 = vmatpush1.bf16.msra.mxu0 %v504
    %1196 = vmatprep.subr.bf16.mxu0 %v509
    %1197 = vmatpush1.bf16.msra.mxu0 %v508
    %1198 = vmatprep.subr.bf16.mxu0 %v513
    %1199 = vmatpush1.bf16.msra.mxu0 %v512
    %1200 = vmatprep.subr.bf16.mxu0 %v517
    %1201 = vmatpush1.bf16.msra.mxu0 %v516
    %1202 = vmatprep.subr.bf16.mxu0 %v521
    %1203 = vmatpush1.bf16.msra.mxu0 %v520
    %1204 = vmatprep.subr.bf16.mxu0 %v525
    %1205 = vmatpush1.bf16.msra.mxu0 %v524
    %1206 = vmatprep.subr.bf16.mxu0 %v529
    %1207 = vmatpush1.bf16.msra.mxu0 %v528
    %1208 = vmatprep.subr.bf16.mxu0 0
    %1209 = vmatpush1.bf16.msra.mxu0 0
    %1210 = vmatprep.subr.bf16.mxu0 0
    %1211 = vmatpush1.bf16.msra.mxu0 0
    %1212 = vmatprep.subr.bf16.mxu0 0
    %1213 = vmatpush1.bf16.msra.mxu0 0
    %1214 = vmatprep.subr.bf16.mxu0 0
    %1215 = vmatpush1.bf16.msra.mxu0 0
    %1216 = vmatprep.subr.bf16.mxu0 0
    %1217 = vmatpush1.bf16.msra.mxu0 0
    %1218 = vmatprep.subr.bf16.mxu0 0
    %1219 = vmatpush1.bf16.msra.mxu0 0
    %1220 = vmatprep.subr.bf16.mxu0 0
    %1221 = vmatpush1.bf16.msra.mxu0 0
    %1222 = vmatprep.subr.bf16.mxu0 0
    %1223 = vmatpush1.bf16.msra.mxu0 0
    %1224 = vmatprep.mubr.bf16.mxu0 0
    %1225 = vmatmul.mubr.bf16.gmra.mrb[0].mxu0 %v1143
    %v1226 = vpop.f32.mrb[0].mxu0
    %v1227 = vadd.f32 0.0, %v1226
    %v1228 = vpop.f32.mrb[0].mxu0
    %v1229 = vadd.f32 0.0, %v1228
    %v1230 = vpop.f32.mrb[0].mxu0
    %v1231 = vpop.f32.mrb[0].mxu0
    %1232 = vdwg.mxu0
    %v1233 = vadd.f32 %v1147, %v1186
    %v1234 = vadd.f32 %v1148, %v1188
    %v1235 = vadd.f32 %v1149, %v1227
    %v1236 = vadd.f32 %v1150, %v1229
    %v1237 = vxor.u32 %v1233, 2147483648
    %v1238 = vmul.f32 %v1237, 1.442695
    %v1239 = vpow.pop %v1238
    %v1240 = vadd.f32 %v1239, 1.0
    %v1241 = vrcp.pop %v1240
    %v1242 = vmul.f32 1.0, %v1241
    %v1243 = vxor.u32 %v1234, 2147483648
    %v1244 = vmul.f32 %v1243, 1.442695
    %v1245 = vpow.pop %v1244
    %v1246 = vadd.f32 %v1245, 1.0
    %v1247 = vrcp.pop %v1246
    %v1248 = vmul.f32 1.0, %v1247
    %v1249 = vtanh.pop %v1235
    %v1250 = vxor.u32 %v1236, 2147483648
    %v1251 = vmul.f32 %v1250, 1.442695
    %v1252 = vpow.pop %v1251
    %v1253 = vadd.f32 %v1252, 1.0
    %v1254 = vrcp.pop %v1253
    %v1255 = vmul.f32 1.0, %v1254
    %v1256 = vmul.f32 %v1248, %v1140
    %v1257 = vmul.f32 %v1242, %v1249
    %v1258 = vadd.f32 %v1256, %v1257
    %v1259 = vtanh.pop %v1258
    %v1260 = vmul.f32 %v1255, %v1259
    %v1261 = vpack.c.bf16 %v1260, %v1260
    %s1262 = scalar_lea.vmem [#allocation13], 20
    %1263 = vst [vmem:[%s1262] sm:$0xf] %v1261
    %s1264 = scalar_lea.vmem [#allocation2], 192
    %v1265 = vld [vmem:[%s1264] sm:$0xff]
    %v1266 = vld [vmem:[%s1264 + $0x8] sm:$0xff]
    %v1267 = vld [vmem:[%s1264 + $0x10] sm:$0xff]
    %v1268 = vld [vmem:[%s1264 + $0x18] sm:$0xff]
    %1269 = vmatprep.subr.bf16.mxu0 %v499
    %1270 = vmatpush1.bf16.msra.mxu0 %v498
    %1271 = vmatprep.subr.bf16.mxu0 %v503
    %1272 = vmatpush1.bf16.msra.mxu0 %v502
    %1273 = vmatprep.subr.bf16.mxu0 %v507
    %1274 = vmatpush1.bf16.msra.mxu0 %v506
    %1275 = vmatprep.subr.bf16.mxu0 %v511
    %1276 = vmatpush1.bf16.msra.mxu0 %v510
    %1277 = vmatprep.subr.bf16.mxu0 %v515
    %1278 = vmatpush1.bf16.msra.mxu0 %v514
    %1279 = vmatprep.subr.bf16.mxu0 %v519
    %1280 = vmatpush1.bf16.msra.mxu0 %v518
    %1281 = vmatprep.subr.bf16.mxu0 %v523
    %1282 = vmatpush1.bf16.msra.mxu0 %v522
    %1283 = vmatprep.subr.bf16.mxu0 %v527
    %1284 = vmatpush1.bf16.msra.mxu0 %v526
    %1285 = vmatprep.subr.bf16.mxu0 0
    %1286 = vmatpush1.bf16.msra.mxu0 0
    %1287 = vmatprep.subr.bf16.mxu0 0
    %1288 = vmatpush1.bf16.msra.mxu0 0
    %1289 = vmatprep.subr.bf16.mxu0 0
    %1290 = vmatpush1.bf16.msra.mxu0 0
    %1291 = vmatprep.subr.bf16.mxu0 0
    %1292 = vmatpush1.bf16.msra.mxu0 0
    %1293 = vmatprep.subr.bf16.mxu0 0
    %1294 = vmatpush1.bf16.msra.mxu0 0
    %1295 = vmatprep.subr.bf16.mxu0 0
    %1296 = vmatpush1.bf16.msra.mxu0 0
    %1297 = vmatprep.subr.bf16.mxu0 0
    %1298 = vmatpush1.bf16.msra.mxu0 0
    %1299 = vmatprep.subr.bf16.mxu0 0
    %1300 = vmatpush1.bf16.msra.mxu0 0
    %1301 = vmatprep.mubr.bf16.mxu0 0
    %1302 = vmatmul.mubr.bf16.gmra.mrb[0].mxu0 %v1261
    %v1303 = vpop.f32.mrb[0].mxu0
    %v1304 = vadd.f32 0.0, %v1303
    %v1305 = vpop.f32.mrb[0].mxu0
    %v1306 = vadd.f32 0.0, %v1305
    %v1307 = vpop.f32.mrb[0].mxu0
    %v1308 = vpop.f32.mrb[0].mxu0
    %1309 = vdwg.mxu0
    %1310 = vmatprep.subr.bf16.mxu0 %v501
    %1311 = vmatpush1.bf16.msra.mxu0 %v500
    %1312 = vmatprep.subr.bf16.mxu0 %v505
    %1313 = vmatpush1.bf16.msra.mxu0 %v504
    %1314 = vmatprep.subr.bf16.mxu0 %v509
    %1315 = vmatpush1.bf16.msra.mxu0 %v508
    %1316 = vmatprep.subr.bf16.mxu0 %v513
    %1317 = vmatpush1.bf16.msra.mxu0 %v512
    %1318 = vmatprep.subr.bf16.mxu0 %v517
    %1319 = vmatpush1.bf16.msra.mxu0 %v516
    %1320 = vmatprep.subr.bf16.mxu0 %v521
    %1321 = vmatpush1.bf16.msra.mxu0 %v520
    %1322 = vmatprep.subr.bf16.mxu0 %v525
    %1323 = vmatpush1.bf16.msra.mxu0 %v524
    %1324 = vmatprep.subr.bf16.mxu0 %v529
    %1325 = vmatpush1.bf16.msra.mxu0 %v528
    %1326 = vmatprep.subr.bf16.mxu0 0
    %1327 = vmatpush1.bf16.msra.mxu0 0
    %1328 = vmatprep.subr.bf16.mxu0 0
    %1329 = vmatpush1.bf16.msra.mxu0 0
    %1330 = vmatprep.subr.bf16.mxu0 0
    %1331 = vmatpush1.bf16.msra.mxu0 0
    %1332 = vmatprep.subr.bf16.mxu0 0
    %1333 = vmatpush1.bf16.msra.mxu0 0
    %1334 = vmatprep.subr.bf16.mxu0 0
    %1335 = vmatpush1.bf16.msra.mxu0 0
    %1336 = vmatprep.subr.bf16.mxu0 0
    %1337 = vmatpush1.bf16.msra.mxu0 0
    %1338 = vmatprep.subr.bf16.mxu0 0
    %1339 = vmatpush1.bf16.msra.mxu0 0
    %1340 = vmatprep.subr.bf16.mxu0 0
    %1341 = vmatpush1.bf16.msra.mxu0 0
    %1342 = vmatprep.mubr.bf16.mxu0 0
    %1343 = vmatmul.mubr.bf16.gmra.mrb[0].mxu0 %v1261
    %v1344 = vpop.f32.mrb[0].mxu0
    %v1345 = vadd.f32 0.0, %v1344
    %v1346 = vpop.f32.mrb[0].mxu0
    %v1347 = vadd.f32 0.0, %v1346
    %v1348 = vpop.f32.mrb[0].mxu0
    %v1349 = vpop.f32.mrb[0].mxu0
    %1350 = vdwg.mxu0
    %v1351 = vadd.f32 %v1265, %v1304
    %v1352 = vadd.f32 %v1266, %v1306
    %v1353 = vadd.f32 %v1267, %v1345
    %v1354 = vadd.f32 %v1268, %v1347
    %v1355 = vxor.u32 %v1351, 2147483648
    %v1356 = vmul.f32 %v1355, 1.442695
    %v1357 = vpow.pop %v1356
    %v1358 = vadd.f32 %v1357, 1.0
    %v1359 = vrcp.pop %v1358
    %v1360 = vmul.f32 1.0, %v1359
    %v1361 = vxor.u32 %v1352, 2147483648
    %v1362 = vmul.f32 %v1361, 1.442695
    %v1363 = vpow.pop %v1362
    %v1364 = vadd.f32 %v1363, 1.0
    %v1365 = vrcp.pop %v1364
    %v1366 = vmul.f32 1.0, %v1365
    %v1367 = vtanh.pop %v1353
    %v1368 = vxor.u32 %v1354, 2147483648
    %v1369 = vmul.f32 %v1368, 1.442695
    %v1370 = vpow.pop %v1369
    %v1371 = vadd.f32 %v1370, 1.0
    %v1372 = vrcp.pop %v1371
    %v1373 = vmul.f32 1.0, %v1372
    %v1374 = vmul.f32 %v1366, %v1258
    %v1375 = vmul.f32 %v1360, %v1367
    %v1376 = vadd.f32 %v1374, %v1375
    %v1377 = vtanh.pop %v1376
    %v1378 = vmul.f32 %v1373, %v1377
    %v1379 = vpack.c.bf16 %v1378, %v1378
    %s1380 = scalar_lea.vmem [#allocation13], 24
    %1381 = vst [vmem:[%s1380] sm:$0xf] %v1379
    %s1382 = scalar_lea.vmem [#allocation2], 224
    %v1383 = vld [vmem:[%s1382] sm:$0xff]
    %v1384 = vld [vmem:[%s1382 + $0x8] sm:$0xff]
    %v1385 = vld [vmem:[%s1382 + $0x10] sm:$0xff]
    %v1386 = vld [vmem:[%s1382 + $0x18] sm:$0xff]
    %1387 = vmatprep.subr.bf16.mxu0 %v499
    %1388 = vmatpush1.bf16.msra.mxu0 %v498
    %1389 = vmatprep.subr.bf16.mxu0 %v503
    %1390 = vmatpush1.bf16.msra.mxu0 %v502
    %1391 = vmatprep.subr.bf16.mxu0 %v507
    %1392 = vmatpush1.bf16.msra.mxu0 %v506
    %1393 = vmatprep.subr.bf16.mxu0 %v511
    %1394 = vmatpush1.bf16.msra.mxu0 %v510
    %1395 = vmatprep.subr.bf16.mxu0 %v515
    %1396 = vmatpush1.bf16.msra.mxu0 %v514
    %1397 = vmatprep.subr.bf16.mxu0 %v519
    %1398 = vmatpush1.bf16.msra.mxu0 %v518
    %1399 = vmatprep.subr.bf16.mxu0 %v523
    %1400 = vmatpush1.bf16.msra.mxu0 %v522
    %1401 = vmatprep.subr.bf16.mxu0 %v527
    %1402 = vmatpush1.bf16.msra.mxu0 %v526
    %1403 = vmatprep.subr.bf16.mxu0 0
    %1404 = vmatpush1.bf16.msra.mxu0 0
    %1405 = vmatprep.subr.bf16.mxu0 0
    %1406 = vmatpush1.bf16.msra.mxu0 0
    %1407 = vmatprep.subr.bf16.mxu0 0
    %1408 = vmatpush1.bf16.msra.mxu0 0
    %1409 = vmatprep.subr.bf16.mxu0 0
    %1410 = vmatpush1.bf16.msra.mxu0 0
    %1411 = vmatprep.subr.bf16.mxu0 0
    %1412 = vmatpush1.bf16.msra.mxu0 0
    %1413 = vmatprep.subr.bf16.mxu0 0
    %1414 = vmatpush1.bf16.msra.mxu0 0
    %1415 = vmatprep.subr.bf16.mxu0 0
    %1416 = vmatpush1.bf16.msra.mxu0 0
    %1417 = vmatprep.subr.bf16.mxu0 0
    %1418 = vmatpush1.bf16.msra.mxu0 0
    %1419 = vmatprep.mubr.bf16.mxu0 0
    %1420 = vmatmul.mubr.bf16.gmra.mrb[0].mxu0 %v1379
    %v1421 = vpop.f32.mrb[0].mxu0
    %v1422 = vadd.f32 0.0, %v1421
    %v1423 = vpop.f32.mrb[0].mxu0
    %v1424 = vadd.f32 0.0, %v1423
    %v1425 = vpop.f32.mrb[0].mxu0
    %v1426 = vpop.f32.mrb[0].mxu0
    %1427 = vdwg.mxu0
    %1428 = vmatprep.subr.bf16.mxu0 %v501
    %1429 = vmatpush1.bf16.msra.mxu0 %v500
    %1430 = vmatprep.subr.bf16.mxu0 %v505
    %1431 = vmatpush1.bf16.msra.mxu0 %v504
    %1432 = vmatprep.subr.bf16.mxu0 %v509
    %1433 = vmatpush1.bf16.msra.mxu0 %v508
    %1434 = vmatprep.subr.bf16.mxu0 %v513
    %1435 = vmatpush1.bf16.msra.mxu0 %v512
    %1436 = vmatprep.subr.bf16.mxu0 %v517
    %1437 = vmatpush1.bf16.msra.mxu0 %v516
    %1438 = vmatprep.subr.bf16.mxu0 %v521
    %1439 = vmatpush1.bf16.msra.mxu0 %v520
    %1440 = vmatprep.subr.bf16.mxu0 %v525
    %1441 = vmatpush1.bf16.msra.mxu0 %v524
    %1442 = vmatprep.subr.bf16.mxu0 %v529
    %1443 = vmatpush1.bf16.msra.mxu0 %v528
    %1444 = vmatprep.subr.bf16.mxu0 0
    %1445 = vmatpush1.bf16.msra.mxu0 0
    %1446 = vmatprep.subr.bf16.mxu0 0
    %1447 = vmatpush1.bf16.msra.mxu0 0
    %1448 = vmatprep.subr.bf16.mxu0 0
    %1449 = vmatpush1.bf16.msra.mxu0 0
    %1450 = vmatprep.subr.bf16.mxu0 0
    %1451 = vmatpush1.bf16.msra.mxu0 0
    %1452 = vmatprep.subr.bf16.mxu0 0
    %1453 = vmatpush1.bf16.msra.mxu0 0
    %1454 = vmatprep.subr.bf16.mxu0 0
    %1455 = vmatpush1.bf16.msra.mxu0 0
    %1456 = vmatprep.subr.bf16.mxu0 0
    %1457 = vmatpush1.bf16.msra.mxu0 0
    %1458 = vmatprep.subr.bf16.mxu0 0
    %1459 = vmatpush1.bf16.msra.mxu0 0
    %1460 = vmatprep.mubr.bf16.mxu0 0
    %1461 = vmatmul.mubr.bf16.gmra.mrb[0].mxu0 %v1379
    %v1462 = vpop.f32.mrb[0].mxu0
    %v1463 = vadd.f32 0.0, %v1462
    %v1464 = vpop.f32.mrb[0].mxu0
    %v1465 = vadd.f32 0.0, %v1464
    %v1466 = vpop.f32.mrb[0].mxu0
    %v1467 = vpop.f32.mrb[0].mxu0
    %1468 = vdwg.mxu0
    %v1469 = vadd.f32 %v1383, %v1422
    %v1470 = vadd.f32 %v1384, %v1424
    %v1471 = vadd.f32 %v1385, %v1463
    %v1472 = vadd.f32 %v1386, %v1465
    %v1473 = vxor.u32 %v1469, 2147483648
    %v1474 = vmul.f32 %v1473, 1.442695
    %v1475 = vpow.pop %v1474
    %v1476 = vadd.f32 %v1475, 1.0
    %v1477 = vrcp.pop %v1476
    %v1478 = vmul.f32 1.0, %v1477
    %v1479 = vxor.u32 %v1470, 2147483648
    %v1480 = vmul.f32 %v1479, 1.442695
    %v1481 = vpow.pop %v1480
    %v1482 = vadd.f32 %v1481, 1.0
    %v1483 = vrcp.pop %v1482
    %v1484 = vmul.f32 1.0, %v1483
    %v1485 = vtanh.pop %v1471
    %v1486 = vxor.u32 %v1472, 2147483648
    %v1487 = vmul.f32 %v1486, 1.442695
    %v1488 = vpow.pop %v1487
    %v1489 = vadd.f32 %v1488, 1.0
    %v1490 = vrcp.pop %v1489
    %v1491 = vmul.f32 1.0, %v1490
    %v1492 = vmul.f32 %v1484, %v1376
    %v1493 = vmul.f32 %v1478, %v1485
    %v1494 = vadd.f32 %v1492, %v1493
    %v1495 = vtanh.pop %v1494
    %v1496 = vmul.f32 %v1491, %v1495
    %v1497 = vpack.c.bf16 %v1496, %v1496
    %s1498 = scalar_lea.vmem [#allocation13], 28
    %1499 = vst [vmem:[%s1498] sm:$0xf] %v1497
    %1500 = vst [vmem:[#allocation3] sm:$0xf] %v1497
    %1501 = vst [vmem:[#allocation4] sm:$0xff] %v1494
    // Predicated region
    $region46: #{tpu_custom_call.1} parent=1 // pred_check
      %p1502 = pneg %p82
    $region47: #{tpu_custom_call.1} parent=1 // pred_check_branch
      %1504 = sbr.rel (%p1502) target = $region49
    $region48: #{tpu_custom_call.1} parent=1 // pred_region
      %v1505 = vld [vmem:[#allocation3] sm:$0xf]
      %v1506 = vunpack.c.l.bf16 %v1505
      %1507 = vst [vmem:[#allocation14] sm:$0xff] %v1506
      %v1508 = vld [vmem:[#allocation4] sm:$0xff]
      %1509 = vst [vmem:[#allocation16] sm:$0xff] %v1508
    $region49: #{tpu_custom_call.1} parent=1 // pred_fallthru
      _
    // Predicated region
    $region50: #{tpu_custom_call.1} parent=1 // pred_check
      _
    $region51: #{tpu_custom_call.1} parent=1 // pred_check_branch
      %1511 = sbr.rel (0) target = $region53
    $region52: #{tpu_custom_call.1} parent=1 // pred_region
      %s1513 = ssub.s32 512, 512
      %1514 = vsyncadd [#allocation7], %s1513
      %s1515 = sshll.u32 [#allocation13], 4
      %s1516 = int_to_ptr.vmem [resolvable:$true] %s1515
      %1521 = dma.vmem_to_hbm [thread:$0]  %s1516, 512, %s6, [#allocation7], 64, 64, 4
    $region53: #{tpu_custom_call.1} parent=1 // pred_fallthru
      _
    // Predicated region
    $region54: #{tpu_custom_call.1} parent=1 // pred_check
      _
    $region55: #{tpu_custom_call.1} parent=1 // pred_check_branch
      %1523 = sbr.rel (0) target = $region57
    $region56: #{tpu_custom_call.1} parent=1 // pred_region
      %s1525 = ssub.s32 128, 128
      %1526 = vsyncadd [#allocation15], %s1525
      %s1528 = sshll.u32 [#allocation14], 4
      %s1529 = int_to_ptr.vmem [resolvable:$true] %s1528
      %1531 = dma.vmem_to_hbm [thread:$0]  %s1529, 128, %s7, [#allocation15]
    $region57: #{tpu_custom_call.1} parent=1 // pred_fallthru
      _
    // Predicated region
    $region58: #{tpu_custom_call.1} parent=1 // pred_check
      _
    $region59: #{tpu_custom_call.1} parent=1 // pred_check_branch
      %1533 = sbr.rel (0) target = $region61
    $region60: #{tpu_custom_call.1} parent=1 // pred_region
      %s1535 = ssub.s32 128, 128
      %1536 = vsyncadd [#allocation15], %s1535
      %s1538 = sshll.u32 [#allocation16], 4
      %s1539 = int_to_ptr.vmem [resolvable:$true] %s1538
      %1541 = dma.vmem_to_hbm [thread:$0]  %s1539, 128, %s8, [#allocation15]
    $region61: #{tpu_custom_call.1} parent=1 // pred_fallthru
      _
    // Predicated region
    $region62: #{tpu_custom_call.1} parent=1 // pred_check
      _
    $region63: #{tpu_custom_call.1} parent=1 // pred_check_branch
      %1543 = sbr.rel (0) target = $region65
    $region64: #{tpu_custom_call.1} parent=1 // pred_region
      %1544 = dma.done [#allocation7], 512
    $region65: #{tpu_custom_call.1} parent=1 // pred_fallthru
      _
    // Predicated region
    $region66: #{tpu_custom_call.1} parent=1 // pred_check
      _
    $region67: #{tpu_custom_call.1} parent=1 // pred_check_branch
      %1546 = sbr.rel (0) target = $region69
    $region68: #{tpu_custom_call.1} parent=1 // pred_region
      %1547 = dma.done [#allocation15], 128
    $region69: #{tpu_custom_call.1} parent=1 // pred_fallthru
      _
    // Predicated region
    $region70: #{tpu_custom_call.1} parent=1 // pred_check
      _
    $region71: #{tpu_custom_call.1} parent=1 // pred_check_branch
      %1549 = sbr.rel (0) target = $region73
    $region72: #{tpu_custom_call.1} parent=1 // pred_region
      %1550 = dma.done [#allocation15], 128
    $region73: #{tpu_custom_call.1} parent=1 // pred_fallthru
      _
    %1551 = vsyncpa [#allocation6], 1
    %1552 = vsyncpa [#allocation9], 1
    %1553 = vsyncpa [#allocation12], 1
    %1554 = vsyncpa [#allocation7], 1
    %1555 = vsyncpa [#allocation15], 1

</llo_original>
